<compile_context>
chip_gen: v7x
topology: tpu7x:2x2x1
jax: 0.10.0
libtpu: 0.0.40
codegen_flags: <defaults>
</compile_context>

<pallas_src>
import jax
import jax.numpy as jnp
import numpy as np
from jax import lax
from jax.experimental import pallas as pl
from jax.experimental.pallas import tpu as pltpu


def _decoder_kernel(enc_out_ref, enc_hid_ref, emb_gx_ref, w_big_ref,
                    big_bias_ref, kproj_all_ref, small_ref,
                    dec_out_ref, hid_out_ref, attn_ref):
    B, S, E = enc_out_ref.shape
    H = enc_hid_ref.shape[-1]
    V = dec_out_ref.shape[-1]
    T = dec_out_ref.shape[0] // B
    H4 = 4 * H

    keys = enc_out_ref[...]                                   # (B, S, E) f32
    keys_flat = keys.reshape(B * S, E)
    small = small_ref[...]                                    # (2, 4H)

    # --- hoisted, time-invariant key projections (single flat MXU matmul) ---
    # kall = keys @ [Ua | Wih_ctx] + [uab+wab | 0]
    kall = (jnp.dot(keys_flat, kproj_all_ref[...],
                    preferred_element_type=jnp.float32)
            + small[0:1, :]).reshape(B, S, H4)
    k_proj = kall[:, :, :H]                                   # (B, S, H)  attn keys
    kc = kall[:, :, H:]                                       # (B, S, 3H) context gates

    # --- loop-invariant operands ---
    emb_gx = emb_gx_ref[...]                                  # (V, 3H) = emb@wih_x + bih
    w_big = w_big_ref[...]                                    # (H, 4H+V) = [Wa|Whh|Wout]
    big_bias = big_bias_ref[...]                              # (1, 4H+V) = [0 | bhh | bout]
    va_row = small[1, :H]                                     # (H,)
    col = lax.broadcasted_iota(jnp.int32, (B, V), 1)          # for greedy argmax

    h0 = enc_hid_ref[...]                                     # (B, H)
    fused0 = jnp.dot(h0, w_big, preferred_element_type=jnp.float32) + big_bias
    hq0 = fused0[:, :H4]                                      # (B, 4H) = [q | gh(+bhh)]
    gx_x0 = jnp.broadcast_to(emb_gx[0:1, :], (B, 3 * H))      # SOS token id = 0

    def step(t, carry):
        h, hq, gx_x = carry
        q = hq[:, :H]                                         # wab folded into k_proj
        gh = hq[:, H:]                                        # bhh already folded in

        # --- Bahdanau attention (vab dropped: softmax invariant to constants) ---
        t_act = jnp.tanh(q[:, None, :] + k_proj)              # (B, S, H)
        scores = jnp.sum(t_act * va_row[None, None, :], axis=-1)   # (B, S)
        m = jnp.max(scores, axis=-1, keepdims=True)
        e = jnp.exp(scores - m)
        weights = e * pl.reciprocal(jnp.sum(e, axis=-1, keepdims=True), approx=True)

        # --- GRU step (PyTorch gate order r, z, n); no per-step context matmul ---
        gx = gx_x + jnp.sum(weights[:, :, None] * kc, axis=1)      # (B, 3H)
        r = jax.nn.sigmoid(gx[:, :H] + gh[:, :H])
        z = jax.nn.sigmoid(gx[:, H:2 * H] + gh[:, H:2 * H])
        n = jnp.tanh(gx[:, 2 * H:] + r * gh[:, 2 * H:])
        h_new = (1.0 - z) * n + z * h                         # (B, H)

        # --- single fused h_new matmul: [Wa | Whh | Wout]; slice at lane tile 128 ---
        fused = jnp.dot(h_new, w_big, preferred_element_type=jnp.float32) + big_bias
        logits = fused[:, H4:]                                # (B, V)

        # dense stores (T*B rows): fewer masked partial stores / denser writeback
        dec_out_ref[pl.ds(t * B, B), :] = logits.astype(dec_out_ref.dtype)
        attn_ref[pl.ds(t * B, B), :] = weights.astype(attn_ref.dtype)

        # --- greedy next token (argmax, first index on ties) -> pre-projected gates ---
        # TODO(synk): teacher-forcing path (target_tensor + torch.rand(1) > 0.1)
        # not implemented; this is the target_tensor=None greedy-decoding path.
        max_val = jnp.max(logits, axis=-1, keepdims=True)
        idx = jnp.min(jnp.where(logits >= max_val, col, V), axis=-1, keepdims=True)
        onehot = (idx == col).astype(jnp.float32)             # (B, V)
        gx_next = jnp.dot(onehot, emb_gx, preferred_element_type=jnp.float32)
        return h_new, fused[:, :H4], gx_next

    # small T -> full unroll; for large max_len switch to unroll=2..4 or False.
    h_final, _, _ = lax.fori_loop(0, T, step, (h0, hq0, gx_x0), unroll=True)
    hid_out_ref[...] = h_final.astype(hid_out_ref.dtype)


def attn_gru_decoder(encoder_out, encoder_hidden, max_len, p):
    """encoder_out: (B, S, E) f32, encoder_hidden: (1, B, H) f32."""
    B, S, E = encoder_out.shape
    H = encoder_hidden.shape[-1]
    V = p['emb'].shape[0]
    f32 = jnp.float32
    enc_hid2d = encoder_hidden[0]                             # (B, H)

    wih_x = p['wih'][:H, :]                                   # (H, 3H) embed part
    wih_c = p['wih'][H:, :]                                   # (E, 3H) context part

    # --- one-time weight folding / packing (plain XLA ops) ---
    w_big = jnp.concatenate([p['wa'], p['whh'], p['wout']], axis=1)       # (H, 4H+V)
    big_bias = jnp.concatenate(
        [jnp.zeros((1, H), f32), p['bhh'], p['bout']], axis=1)            # (1, 4H+V)
    emb_gx = jnp.dot(p['emb'], wih_x) + p['bih']                          # (V, 3H)
    kproj_all = jnp.concatenate([p['ua'], wih_c], axis=1)                 # (E, 4H)
    small = jnp.zeros((2, 4 * H), f32)
    small = small.at[0, :H].set((p['uab'] + p['wab'])[0])                 # uab + wab
    small = small.at[1, :H].set(p['va'][:, 0])                            # va

    inputs = (encoder_out, enc_hid2d, emb_gx, w_big, big_bias, kproj_all, small)

    out_shape = (
        jax.ShapeDtypeStruct((max_len * B, V), f32),   # decoder logits, dense rows
        jax.ShapeDtypeStruct((B, H), f32),             # final hidden
        jax.ShapeDtypeStruct((max_len * B, S), f32),   # attention weights, dense rows
    )

    vmem = pl.BlockSpec(memory_space=pltpu.MemorySpace.VMEM)
    dec_flat, hid, attn_flat = pl.pallas_call(
        _decoder_kernel,
        out_shape=out_shape,
        in_specs=[vmem] * len(inputs),
        out_specs=(vmem, vmem, vmem),
        compiler_params=pltpu.CompilerParams(vmem_limit_bytes=16 * 1024 * 1024),
    )(*inputs)

    # match PyTorch return convention: (B, T, V), (num_layers=1, B, H), (B, T, S)
    dec_out = jnp.transpose(dec_flat.reshape(max_len, B, V), (1, 0, 2))
    attn = jnp.transpose(attn_flat.reshape(max_len, B, S), (1, 0, 2))
    return dec_out, hid[None, :, :], attn


def reference(encoder_out, encoder_hidden, max_len, p):
    """Pure-JAX reference mirroring the PyTorch forward (greedy decoding)."""
    B, S, E = encoder_out.shape
    H = encoder_hidden.shape[-1]
    h = encoder_hidden[0]
    x_emb = jnp.broadcast_to(p['emb'][0:1], (B, H))
    outs, attns = [], []
    for _ in range(max_len):
        q = h @ p['wa'] + p['wab'][0]
        k = jnp.einsum('bse,eh->bsh', encoder_out, p['ua']) + p['uab'][0]
        t = jnp.tanh(q[:, None, :] + k)
        scores = jnp.sum(t * p['va'][:, 0], axis=-1) + p['vab'][0, 0]
        w = jax.nn.softmax(scores, axis=-1)
        ctx = jnp.sum(w[:, :, None] * encoder_out, axis=1)
        x = jnp.concatenate([x_emb, ctx], axis=-1)
        gx = x @ p['wih'] + p['bih'][0]
        gh = h @ p['whh'] + p['bhh'][0]
        r = jax.nn.sigmoid(gx[:, :H] + gh[:, :H])
        z = jax.nn.sigmoid(gx[:, H:2 * H] + gh[:, H:2 * H])
        n = jnp.tanh(gx[:, 2 * H:] + r * gh[:, 2 * H:])
        h = (1.0 - z) * n + z * h
        logits = h @ p['wout'] + p['bout'][0]
        outs.append(logits[:, None, :])
        attns.append(w[:, None, :])
        ids = jnp.argmax(logits, axis=-1)
        x_emb = p['emb'][ids]
    return jnp.concatenate(outs, 1), h[None], jnp.concatenate(attns, 1)


if __name__ == "__main__":
    # small shapes consistent with the module
    B, S, H, V, max_len = 2, 8, 32, 16, 6
    bidirection = True
    E = 2 * H if bidirection else H          # encoder feature dim
    IN = H + E                               # GRU input dim (3H if bidirection)

    key = jax.random.PRNGKey(0)
    ks = jax.random.split(key, 16)

    def w(k, shape, scale=0.1):
        return (scale * jax.random.normal(k, shape)).astype(jnp.float32)

    params = {
        'emb':  w(ks[0], (V, H)),
        # Bahdanau attention (weights stored transposed for right-multiplication)
        'wa':   w(ks[1], (H, H)),  'wab': w(ks[2], (1, H)),
        'ua':   w(ks[3], (E, H)),  'uab': w(ks[4], (1, H)),
        'va':   w(ks[5], (H, 1)),  'vab': w(ks[6], (1, 1)),
        # GRU (gate order r, z, n), weights transposed: (in, 3H) and (H, 3H)
        'wih':  w(ks[7], (IN, 3 * H)), 'bih': w(ks[8], (1, 3 * H)),
        'whh':  w(ks[9], (H, 3 * H)),  'bhh': w(ks[10], (1, 3 * H)),
        # output projection
        'wout': w(ks[11], (H, V)), 'bout': w(ks[12], (1, V)),
    }

    encoder_out = jax.random.normal(ks[13], (B, S, E), jnp.float32)
    encoder_hidden = jax.random.normal(ks[14], (1, B, H), jnp.float32)

    dec_out, dec_hid, attns = attn_gru_decoder(encoder_out, encoder_hidden, max_len, params)
    jax.block_until_ready(dec_out)
    jax.block_until_ready(dec_hid)
    jax.block_until_ready(attns)

    ref_out, ref_hid, ref_attn = reference(encoder_out, encoder_hidden, max_len, params)

    assert dec_out.shape == (B, max_len, V)
    assert dec_hid.shape == (1, B, H)
    assert attns.shape == (B, max_len, S)
    np.testing.assert_allclose(np.asarray(dec_out), np.asarray(ref_out), rtol=2e-3, atol=2e-3)
    np.testing.assert_allclose(np.asarray(dec_hid), np.asarray(ref_hid), rtol=2e-3, atol=2e-3)
    np.testing.assert_allclose(np.asarray(attns), np.asarray(ref_attn), rtol=2e-3, atol=2e-3)

    print("KERNEL_OK")
</pallas_src>

<mosaic_0001>
module attributes {stable_mosaic.version = 11 : i64} {
  func.func @_decoder_kernel(%arg0: memref<2x8x64xf32, #tpu.memory_space<vmem>>, %arg1: memref<2x32xf32, #tpu.memory_space<vmem>>, %arg2: memref<16x96xf32, #tpu.memory_space<vmem>>, %arg3: memref<32x144xf32, #tpu.memory_space<vmem>>, %arg4: memref<1x144xf32, #tpu.memory_space<vmem>>, %arg5: memref<64x128xf32, #tpu.memory_space<vmem>>, %arg6: memref<2x128xf32, #tpu.memory_space<vmem>>, %arg7: memref<12x16xf32, #tpu.memory_space<vmem>>, %arg8: memref<2x32xf32, #tpu.memory_space<vmem>>, %arg9: memref<12x8xf32, #tpu.memory_space<vmem>>) attributes {dimension_semantics = [], scalar_prefetch = 0 : i64, scratch_operands = 0 : i64, tpu.core_type = #tpu.core_type<tc>} {
    %c0 = arith.constant 0 : index
    %c0_0 = arith.constant 0 : index
    %c0_1 = arith.constant 0 : index
    %0 = vector.load %arg0[%c0, %c0_0, %c0_1] : memref<2x8x64xf32, #tpu.memory_space<vmem>>, vector<2x8x64xf32>
    %1 = vector.shape_cast %0 : vector<2x8x64xf32> to vector<16x64xf32>
    %c0_2 = arith.constant 0 : index
    %c0_3 = arith.constant 0 : index
    %2 = vector.load %arg6[%c0_2, %c0_3] : memref<2x128xf32, #tpu.memory_space<vmem>>, vector<2x128xf32>
    %c0_4 = arith.constant 0 : index
    %c0_5 = arith.constant 0 : index
    %3 = vector.load %arg5[%c0_4, %c0_5] : memref<64x128xf32, #tpu.memory_space<vmem>>, vector<64x128xf32>
    %cst = arith.constant dense<0.000000e+00> : vector<16x128xf32>
    %4 = tpu.matmul %1, %3, %cst {dimension_numbers = #tpu.dot_dimension_numbers<[1], [0], [0], [1], [0, 0, 1, 1], [], []>} : vector<16x64xf32>, vector<64x128xf32>, vector<16x128xf32> -> vector<16x128xf32>
    %5 = vector.extract_strided_slice %2 {offsets = [0, 0], sizes = [1, 128], strides = [1, 1]} : vector<2x128xf32> to vector<1x128xf32>
    %6 = vector.broadcast %5 : vector<1x128xf32> to vector<16x128xf32>
    %7 = arith.addf %4, %6 : vector<16x128xf32>
    %8 = vector.shape_cast %7 : vector<16x128xf32> to vector<2x8x128xf32>
    %9 = vector.extract_strided_slice %8 {offsets = [0, 0, 0], sizes = [2, 8, 32], strides = [1, 1, 1]} : vector<2x8x128xf32> to vector<2x8x32xf32>
    %10 = vector.extract_strided_slice %8 {offsets = [0, 0, 32], sizes = [2, 8, 96], strides = [1, 1, 1]} : vector<2x8x128xf32> to vector<2x8x96xf32>
    %c0_6 = arith.constant 0 : index
    %c0_7 = arith.constant 0 : index
    %11 = vector.load %arg2[%c0_6, %c0_7] : memref<16x96xf32, #tpu.memory_space<vmem>>, vector<16x96xf32>
    %c0_8 = arith.constant 0 : index
    %c0_9 = arith.constant 0 : index
    %12 = vector.load %arg3[%c0_8, %c0_9] : memref<32x144xf32, #tpu.memory_space<vmem>>, vector<32x144xf32>
    %c0_10 = arith.constant 0 : index
    %c0_11 = arith.constant 0 : index
    %13 = vector.load %arg4[%c0_10, %c0_11] : memref<1x144xf32, #tpu.memory_space<vmem>>, vector<1x144xf32>
    %14 = vector.extract_strided_slice %2 {offsets = [1, 0], sizes = [1, 32], strides = [1, 1]} : vector<2x128xf32> to vector<1x32xf32>
    %15 = vector.shape_cast %14 : vector<1x32xf32> to vector<32xf32>
    %16 = tpu.iota {dimensions = array<i32: 1>} : vector<2x16xi32>
    %c0_12 = arith.constant 0 : index
    %c0_13 = arith.constant 0 : index
    %17 = vector.load %arg1[%c0_12, %c0_13] : memref<2x32xf32, #tpu.memory_space<vmem>>, vector<2x32xf32>
    %cst_14 = arith.constant dense<0.000000e+00> : vector<2x144xf32>
    %18 = tpu.matmul %17, %12, %cst_14 {dimension_numbers = #tpu.dot_dimension_numbers<[1], [0], [0], [1], [0, 0, 1, 1], [], []>} : vector<2x32xf32>, vector<32x144xf32>, vector<2x144xf32> -> vector<2x144xf32>
    %19 = vector.broadcast %13 : vector<1x144xf32> to vector<2x144xf32>
    %20 = arith.addf %18, %19 : vector<2x144xf32>
    %21 = vector.extract_strided_slice %20 {offsets = [0, 0], sizes = [2, 128], strides = [1, 1]} : vector<2x144xf32> to vector<2x128xf32>
    %22 = vector.extract_strided_slice %11 {offsets = [0, 0], sizes = [1, 96], strides = [1, 1]} : vector<16x96xf32> to vector<1x96xf32>
    %23 = vector.shape_cast %22 : vector<1x96xf32> to vector<1x96xf32>
    %24 = vector.broadcast %23 : vector<1x96xf32> to vector<2x96xf32>
    %c0_i32 = arith.constant 0 : i32
    %25 = vector.extract_strided_slice %21 {offsets = [0, 0], sizes = [2, 32], strides = [1, 1]} : vector<2x128xf32> to vector<2x32xf32>
    %26 = vector.extract_strided_slice %21 {offsets = [0, 32], sizes = [2, 96], strides = [1, 1]} : vector<2x128xf32> to vector<2x96xf32>
    %27 = vector.shape_cast %25 : vector<2x32xf32> to vector<2x1x32xf32>
    %28 = vector.broadcast %27 : vector<2x1x32xf32> to vector<2x8x32xf32>
    %29 = arith.addf %28, %9 : vector<2x8x32xf32>
    %30 = math.tanh %29 : vector<2x8x32xf32>
    %31 = vector.shape_cast %15 : vector<32xf32> to vector<1x1x32xf32>
    %32 = vector.broadcast %31 : vector<1x1x32xf32> to vector<2x8x32xf32>
    %33 = arith.mulf %30, %32 : vector<2x8x32xf32>
    %cst_15 = arith.constant dense<0.000000e+00> : vector<2x8xf32>
    %34 = vector.multi_reduction <add>, %33, %cst_15 [2] : vector<2x8x32xf32> to vector<2x8xf32>
    %cst_16 = arith.constant dense<0xFF800000> : vector<2xf32>
    %35 = vector.multi_reduction <maximumf>, %34, %cst_16 [1] : vector<2x8xf32> to vector<2xf32>
    %36 = vector.shape_cast %35 : vector<2xf32> to vector<2x1xf32>
    %37 = vector.broadcast %36 : vector<2x1xf32> to vector<2x8xf32>
    %38 = arith.subf %34, %37 : vector<2x8xf32>
    %39 = math.exp %38 : vector<2x8xf32>
    %cst_17 = arith.constant dense<0.000000e+00> : vector<2xf32>
    %40 = vector.multi_reduction <add>, %39, %cst_17 [1] : vector<2x8xf32> to vector<2xf32>
    %41 = vector.shape_cast %40 : vector<2xf32> to vector<2x1xf32>
    %42 = tpu.reciprocal %41 {approx = true} : vector<2x1xf32> -> vector<2x1xf32>
    %43 = vector.broadcast %42 : vector<2x1xf32> to vector<2x8xf32>
    %44 = arith.mulf %39, %43 : vector<2x8xf32>
    %45 = vector.shape_cast %44 : vector<2x8xf32> to vector<2x8x1xf32>
    %46 = vector.broadcast %45 : vector<2x8x1xf32> to vector<2x8x96xf32>
    %47 = arith.mulf %46, %10 : vector<2x8x96xf32>
    %cst_18 = arith.constant dense<0.000000e+00> : vector<2x96xf32>
    %48 = vector.multi_reduction <add>, %47, %cst_18 [1] : vector<2x8x96xf32> to vector<2x96xf32>
    %49 = arith.addf %24, %48 : vector<2x96xf32>
    %50 = vector.extract_strided_slice %49 {offsets = [0, 0], sizes = [2, 32], strides = [1, 1]} : vector<2x96xf32> to vector<2x32xf32>
    %51 = vector.extract_strided_slice %26 {offsets = [0, 0], sizes = [2, 32], strides = [1, 1]} : vector<2x96xf32> to vector<2x32xf32>
    %52 = arith.addf %50, %51 : vector<2x32xf32>
    %53 = arith.negf %52 : vector<2x32xf32>
    %54 = math.exp %53 : vector<2x32xf32>
    %cst_19 = arith.constant 1.000000e+00 : f32
    %55 = vector.broadcast %cst_19 : f32 to vector<2x32xf32>
    %56 = arith.addf %55, %54 : vector<2x32xf32>
    %57 = arith.divf %55, %56 : vector<2x32xf32>
    %58 = vector.extract_strided_slice %49 {offsets = [0, 32], sizes = [2, 32], strides = [1, 1]} : vector<2x96xf32> to vector<2x32xf32>
    %59 = vector.extract_strided_slice %26 {offsets = [0, 32], sizes = [2, 32], strides = [1, 1]} : vector<2x96xf32> to vector<2x32xf32>
    %60 = arith.addf %58, %59 : vector<2x32xf32>
    %61 = arith.negf %60 : vector<2x32xf32>
    %62 = math.exp %61 : vector<2x32xf32>
    %cst_20 = arith.constant 1.000000e+00 : f32
    %63 = vector.broadcast %cst_20 : f32 to vector<2x32xf32>
    %64 = arith.addf %63, %62 : vector<2x32xf32>
    %65 = arith.divf %63, %64 : vector<2x32xf32>
    %66 = vector.extract_strided_slice %49 {offsets = [0, 64], sizes = [2, 32], strides = [1, 1]} : vector<2x96xf32> to vector<2x32xf32>
    %67 = vector.extract_strided_slice %26 {offsets = [0, 64], sizes = [2, 32], strides = [1, 1]} : vector<2x96xf32> to vector<2x32xf32>
    %68 = arith.mulf %57, %67 : vector<2x32xf32>
    %69 = arith.addf %66, %68 : vector<2x32xf32>
    %70 = math.tanh %69 : vector<2x32xf32>
    %cst_21 = arith.constant 1.000000e+00 : f32
    %71 = vector.broadcast %cst_21 : f32 to vector<2x32xf32>
    %72 = arith.subf %71, %65 : vector<2x32xf32>
    %73 = arith.mulf %72, %70 : vector<2x32xf32>
    %74 = arith.mulf %65, %17 : vector<2x32xf32>
    %75 = arith.addf %73, %74 : vector<2x32xf32>
    %cst_22 = arith.constant dense<0.000000e+00> : vector<2x144xf32>
    %76 = tpu.matmul %75, %12, %cst_22 {dimension_numbers = #tpu.dot_dimension_numbers<[1], [0], [0], [1], [0, 0, 1, 1], [], []>} : vector<2x32xf32>, vector<32x144xf32>, vector<2x144xf32> -> vector<2x144xf32>
    %77 = vector.broadcast %13 : vector<1x144xf32> to vector<2x144xf32>
    %78 = arith.addf %76, %77 : vector<2x144xf32>
    %79 = vector.extract_strided_slice %78 {offsets = [0, 128], sizes = [2, 16], strides = [1, 1]} : vector<2x144xf32> to vector<2x16xf32>
    %c2_i32 = arith.constant 2 : i32
    %80 = arith.muli %c0_i32, %c2_i32 : i32
    %81 = arith.index_cast %80 : i32 to index
    %c0_23 = arith.constant 0 : index
    %82 = vector.load %arg7[%81, %c0_23] : memref<12x16xf32, #tpu.memory_space<vmem>>, vector<2x16xf32>
    tpu.vector_store %arg7[%81, %c0_23], %79 {strides = array<i32>} : memref<12x16xf32, #tpu.memory_space<vmem>>, vector<2x16xf32>,
    %c2_i32_24 = arith.constant 2 : i32
    %83 = arith.muli %c0_i32, %c2_i32_24 : i32
    %84 = arith.index_cast %83 : i32 to index
    %c0_25 = arith.constant 0 : index
    %85 = vector.load %arg9[%84, %c0_25] : memref<12x8xf32, #tpu.memory_space<vmem>>, vector<2x8xf32>
    tpu.vector_store %arg9[%84, %c0_25], %44 {strides = array<i32>} : memref<12x8xf32, #tpu.memory_space<vmem>>, vector<2x8xf32>,
    %cst_26 = arith.constant dense<0xFF800000> : vector<2xf32>
    %86 = vector.multi_reduction <maximumf>, %79, %cst_26 [1] : vector<2x16xf32> to vector<2xf32>
    %87 = vector.shape_cast %86 : vector<2xf32> to vector<2x1xf32>
    %88 = vector.broadcast %87 : vector<2x1xf32> to vector<2x16xf32>
    %89 = arith.cmpf oge, %79, %88 : vector<2x16xf32>
    %c16_i32 = arith.constant 16 : i32
    %90 = vector.broadcast %c16_i32 : i32 to vector<2x16xi32>
    %91 = arith.select %89, %16, %90 : vector<2x16xi1>, vector<2x16xi32>
    %cst_27 = arith.constant dense<2147483647> : vector<2xi32>
    %92 = vector.multi_reduction <minsi>, %91, %cst_27 [1] : vector<2x16xi32> to vector<2xi32>
    %93 = vector.shape_cast %92 : vector<2xi32> to vector<2x1xi32>
    %94 = vector.broadcast %93 : vector<2x1xi32> to vector<2x16xi32>
    %95 = arith.cmpi eq, %94, %16 : vector<2x16xi32>
    %96 = arith.extui %95 : vector<2x16xi1> to vector<2x16xi32>
    %97 = arith.sitofp %96 : vector<2x16xi32> to vector<2x16xf32>
    %cst_28 = arith.constant dense<0.000000e+00> : vector<2x96xf32>
    %98 = tpu.matmul %97, %11, %cst_28 {dimension_numbers = #tpu.dot_dimension_numbers<[1], [0], [0], [1], [0, 0, 1, 1], [], []>} : vector<2x16xf32>, vector<16x96xf32>, vector<2x96xf32> -> vector<2x96xf32>
    %99 = vector.extract_strided_slice %78 {offsets = [0, 0], sizes = [2, 128], strides = [1, 1]} : vector<2x144xf32> to vector<2x128xf32>
    %c1_i32 = arith.constant 1 : i32
    %100 = vector.extract_strided_slice %99 {offsets = [0, 0], sizes = [2, 32], strides = [1, 1]} : vector<2x128xf32> to vector<2x32xf32>
    %101 = vector.extract_strided_slice %99 {offsets = [0, 32], sizes = [2, 96], strides = [1, 1]} : vector<2x128xf32> to vector<2x96xf32>
    %102 = vector.shape_cast %100 : vector<2x32xf32> to vector<2x1x32xf32>
    %103 = vector.broadcast %102 : vector<2x1x32xf32> to vector<2x8x32xf32>
    %104 = arith.addf %103, %9 : vector<2x8x32xf32>
    %105 = math.tanh %104 : vector<2x8x32xf32>
    %106 = vector.shape_cast %15 : vector<32xf32> to vector<1x1x32xf32>
    %107 = vector.broadcast %106 : vector<1x1x32xf32> to vector<2x8x32xf32>
    %108 = arith.mulf %105, %107 : vector<2x8x32xf32>
    %cst_29 = arith.constant dense<0.000000e+00> : vector<2x8xf32>
    %109 = vector.multi_reduction <add>, %108, %cst_29 [2] : vector<2x8x32xf32> to vector<2x8xf32>
    %cst_30 = arith.constant dense<0xFF800000> : vector<2xf32>
    %110 = vector.multi_reduction <maximumf>, %109, %cst_30 [1] : vector<2x8xf32> to vector<2xf32>
    %111 = vector.shape_cast %110 : vector<2xf32> to vector<2x1xf32>
    %112 = vector.broadcast %111 : vector<2x1xf32> to vector<2x8xf32>
    %113 = arith.subf %109, %112 : vector<2x8xf32>
    %114 = math.exp %113 : vector<2x8xf32>
    %cst_31 = arith.constant dense<0.000000e+00> : vector<2xf32>
    %115 = vector.multi_reduction <add>, %114, %cst_31 [1] : vector<2x8xf32> to vector<2xf32>
    %116 = vector.shape_cast %115 : vector<2xf32> to vector<2x1xf32>
    %117 = tpu.reciprocal %116 {approx = true} : vector<2x1xf32> -> vector<2x1xf32>
    %118 = vector.broadcast %117 : vector<2x1xf32> to vector<2x8xf32>
    %119 = arith.mulf %114, %118 : vector<2x8xf32>
    %120 = vector.shape_cast %119 : vector<2x8xf32> to vector<2x8x1xf32>
    %121 = vector.broadcast %120 : vector<2x8x1xf32> to vector<2x8x96xf32>
    %122 = arith.mulf %121, %10 : vector<2x8x96xf32>
    %cst_32 = arith.constant dense<0.000000e+00> : vector<2x96xf32>
    %123 = vector.multi_reduction <add>, %122, %cst_32 [1] : vector<2x8x96xf32> to vector<2x96xf32>
    %124 = arith.addf %98, %123 : vector<2x96xf32>
    %125 = vector.extract_strided_slice %124 {offsets = [0, 0], sizes = [2, 32], strides = [1, 1]} : vector<2x96xf32> to vector<2x32xf32>
    %126 = vector.extract_strided_slice %101 {offsets = [0, 0], sizes = [2, 32], strides = [1, 1]} : vector<2x96xf32> to vector<2x32xf32>
    %127 = arith.addf %125, %126 : vector<2x32xf32>
    %128 = arith.negf %127 : vector<2x32xf32>
    %129 = math.exp %128 : vector<2x32xf32>
    %cst_33 = arith.constant 1.000000e+00 : f32
    %130 = vector.broadcast %cst_33 : f32 to vector<2x32xf32>
    %131 = arith.addf %130, %129 : vector<2x32xf32>
    %132 = arith.divf %130, %131 : vector<2x32xf32>
    %133 = vector.extract_strided_slice %124 {offsets = [0, 32], sizes = [2, 32], strides = [1, 1]} : vector<2x96xf32> to vector<2x32xf32>
    %134 = vector.extract_strided_slice %101 {offsets = [0, 32], sizes = [2, 32], strides = [1, 1]} : vector<2x96xf32> to vector<2x32xf32>
    %135 = arith.addf %133, %134 : vector<2x32xf32>
    %136 = arith.negf %135 : vector<2x32xf32>
    %137 = math.exp %136 : vector<2x32xf32>
    %cst_34 = arith.constant 1.000000e+00 : f32
    %138 = vector.broadcast %cst_34 : f32 to vector<2x32xf32>
    %139 = arith.addf %138, %137 : vector<2x32xf32>
    %140 = arith.divf %138, %139 : vector<2x32xf32>
    %141 = vector.extract_strided_slice %124 {offsets = [0, 64], sizes = [2, 32], strides = [1, 1]} : vector<2x96xf32> to vector<2x32xf32>
    %142 = vector.extract_strided_slice %101 {offsets = [0, 64], sizes = [2, 32], strides = [1, 1]} : vector<2x96xf32> to vector<2x32xf32>
    %143 = arith.mulf %132, %142 : vector<2x32xf32>
    %144 = arith.addf %141, %143 : vector<2x32xf32>
    %145 = math.tanh %144 : vector<2x32xf32>
    %cst_35 = arith.constant 1.000000e+00 : f32
    %146 = vector.broadcast %cst_35 : f32 to vector<2x32xf32>
    %147 = arith.subf %146, %140 : vector<2x32xf32>
    %148 = arith.mulf %147, %145 : vector<2x32xf32>
    %149 = arith.mulf %140, %75 : vector<2x32xf32>
    %150 = arith.addf %148, %149 : vector<2x32xf32>
    %cst_36 = arith.constant dense<0.000000e+00> : vector<2x144xf32>
    %151 = tpu.matmul %150, %12, %cst_36 {dimension_numbers = #tpu.dot_dimension_numbers<[1], [0], [0], [1], [0, 0, 1, 1], [], []>} : vector<2x32xf32>, vector<32x144xf32>, vector<2x144xf32> -> vector<2x144xf32>
    %152 = vector.broadcast %13 : vector<1x144xf32> to vector<2x144xf32>
    %153 = arith.addf %151, %152 : vector<2x144xf32>
    %154 = vector.extract_strided_slice %153 {offsets = [0, 128], sizes = [2, 16], strides = [1, 1]} : vector<2x144xf32> to vector<2x16xf32>
    %c2_i32_37 = arith.constant 2 : i32
    %155 = arith.muli %c1_i32, %c2_i32_37 : i32
    %156 = arith.index_cast %155 : i32 to index
    %c0_38 = arith.constant 0 : index
    %157 = vector.load %arg7[%156, %c0_38] : memref<12x16xf32, #tpu.memory_space<vmem>>, vector<2x16xf32>
    tpu.vector_store %arg7[%156, %c0_38], %154 {strides = array<i32>} : memref<12x16xf32, #tpu.memory_space<vmem>>, vector<2x16xf32>,
    %c2_i32_39 = arith.constant 2 : i32
    %158 = arith.muli %c1_i32, %c2_i32_39 : i32
    %159 = arith.index_cast %158 : i32 to index
    %c0_40 = arith.constant 0 : index
    %160 = vector.load %arg9[%159, %c0_40] : memref<12x8xf32, #tpu.memory_space<vmem>>, vector<2x8xf32>
    tpu.vector_store %arg9[%159, %c0_40], %119 {strides = array<i32>} : memref<12x8xf32, #tpu.memory_space<vmem>>, vector<2x8xf32>,
    %cst_41 = arith.constant dense<0xFF800000> : vector<2xf32>
    %161 = vector.multi_reduction <maximumf>, %154, %cst_41 [1] : vector<2x16xf32> to vector<2xf32>
    %162 = vector.shape_cast %161 : vector<2xf32> to vector<2x1xf32>
    %163 = vector.broadcast %162 : vector<2x1xf32> to vector<2x16xf32>
    %164 = arith.cmpf oge, %154, %163 : vector<2x16xf32>
    %c16_i32_42 = arith.constant 16 : i32
    %165 = vector.broadcast %c16_i32_42 : i32 to vector<2x16xi32>
    %166 = arith.select %164, %16, %165 : vector<2x16xi1>, vector<2x16xi32>
    %cst_43 = arith.constant dense<2147483647> : vector<2xi32>
    %167 = vector.multi_reduction <minsi>, %166, %cst_43 [1] : vector<2x16xi32> to vector<2xi32>
    %168 = vector.shape_cast %167 : vector<2xi32> to vector<2x1xi32>
    %169 = vector.broadcast %168 : vector<2x1xi32> to vector<2x16xi32>
    %170 = arith.cmpi eq, %169, %16 : vector<2x16xi32>
    %171 = arith.extui %170 : vector<2x16xi1> to vector<2x16xi32>
    %172 = arith.sitofp %171 : vector<2x16xi32> to vector<2x16xf32>
    %cst_44 = arith.constant dense<0.000000e+00> : vector<2x96xf32>
    %173 = tpu.matmul %172, %11, %cst_44 {dimension_numbers = #tpu.dot_dimension_numbers<[1], [0], [0], [1], [0, 0, 1, 1], [], []>} : vector<2x16xf32>, vector<16x96xf32>, vector<2x96xf32> -> vector<2x96xf32>
    %174 = vector.extract_strided_slice %153 {offsets = [0, 0], sizes = [2, 128], strides = [1, 1]} : vector<2x144xf32> to vector<2x128xf32>
    %c2_i32_45 = arith.constant 2 : i32
    %175 = vector.extract_strided_slice %174 {offsets = [0, 0], sizes = [2, 32], strides = [1, 1]} : vector<2x128xf32> to vector<2x32xf32>
    %176 = vector.extract_strided_slice %174 {offsets = [0, 32], sizes = [2, 96], strides = [1, 1]} : vector<2x128xf32> to vector<2x96xf32>
    %177 = vector.shape_cast %175 : vector<2x32xf32> to vector<2x1x32xf32>
    %178 = vector.broadcast %177 : vector<2x1x32xf32> to vector<2x8x32xf32>
    %179 = arith.addf %178, %9 : vector<2x8x32xf32>
    %180 = math.tanh %179 : vector<2x8x32xf32>
    %181 = vector.shape_cast %15 : vector<32xf32> to vector<1x1x32xf32>
    %182 = vector.broadcast %181 : vector<1x1x32xf32> to vector<2x8x32xf32>
    %183 = arith.mulf %180, %182 : vector<2x8x32xf32>
    %cst_46 = arith.constant dense<0.000000e+00> : vector<2x8xf32>
    %184 = vector.multi_reduction <add>, %183, %cst_46 [2] : vector<2x8x32xf32> to vector<2x8xf32>
    %cst_47 = arith.constant dense<0xFF800000> : vector<2xf32>
    %185 = vector.multi_reduction <maximumf>, %184, %cst_47 [1] : vector<2x8xf32> to vector<2xf32>
    %186 = vector.shape_cast %185 : vector<2xf32> to vector<2x1xf32>
    %187 = vector.broadcast %186 : vector<2x1xf32> to vector<2x8xf32>
    %188 = arith.subf %184, %187 : vector<2x8xf32>
    %189 = math.exp %188 : vector<2x8xf32>
    %cst_48 = arith.constant dense<0.000000e+00> : vector<2xf32>
    %190 = vector.multi_reduction <add>, %189, %cst_48 [1] : vector<2x8xf32> to vector<2xf32>
    %191 = vector.shape_cast %190 : vector<2xf32> to vector<2x1xf32>
    %192 = tpu.reciprocal %191 {approx = true} : vector<2x1xf32> -> vector<2x1xf32>
    %193 = vector.broadcast %192 : vector<2x1xf32> to vector<2x8xf32>
    %194 = arith.mulf %189, %193 : vector<2x8xf32>
    %195 = vector.shape_cast %194 : vector<2x8xf32> to vector<2x8x1xf32>
    %196 = vector.broadcast %195 : vector<2x8x1xf32> to vector<2x8x96xf32>
    %197 = arith.mulf %196, %10 : vector<2x8x96xf32>
    %cst_49 = arith.constant dense<0.000000e+00> : vector<2x96xf32>
    %198 = vector.multi_reduction <add>, %197, %cst_49 [1] : vector<2x8x96xf32> to vector<2x96xf32>
    %199 = arith.addf %173, %198 : vector<2x96xf32>
    %200 = vector.extract_strided_slice %199 {offsets = [0, 0], sizes = [2, 32], strides = [1, 1]} : vector<2x96xf32> to vector<2x32xf32>
    %201 = vector.extract_strided_slice %176 {offsets = [0, 0], sizes = [2, 32], strides = [1, 1]} : vector<2x96xf32> to vector<2x32xf32>
    %202 = arith.addf %200, %201 : vector<2x32xf32>
    %203 = arith.negf %202 : vector<2x32xf32>
    %204 = math.exp %203 : vector<2x32xf32>
    %cst_50 = arith.constant 1.000000e+00 : f32
    %205 = vector.broadcast %cst_50 : f32 to vector<2x32xf32>
    %206 = arith.addf %205, %204 : vector<2x32xf32>
    %207 = arith.divf %205, %206 : vector<2x32xf32>
    %208 = vector.extract_strided_slice %199 {offsets = [0, 32], sizes = [2, 32], strides = [1, 1]} : vector<2x96xf32> to vector<2x32xf32>
    %209 = vector.extract_strided_slice %176 {offsets = [0, 32], sizes = [2, 32], strides = [1, 1]} : vector<2x96xf32> to vector<2x32xf32>
    %210 = arith.addf %208, %209 : vector<2x32xf32>
    %211 = arith.negf %210 : vector<2x32xf32>
    %212 = math.exp %211 : vector<2x32xf32>
    %cst_51 = arith.constant 1.000000e+00 : f32
    %213 = vector.broadcast %cst_51 : f32 to vector<2x32xf32>
    %214 = arith.addf %213, %212 : vector<2x32xf32>
    %215 = arith.divf %213, %214 : vector<2x32xf32>
    %216 = vector.extract_strided_slice %199 {offsets = [0, 64], sizes = [2, 32], strides = [1, 1]} : vector<2x96xf32> to vector<2x32xf32>
    %217 = vector.extract_strided_slice %176 {offsets = [0, 64], sizes = [2, 32], strides = [1, 1]} : vector<2x96xf32> to vector<2x32xf32>
    %218 = arith.mulf %207, %217 : vector<2x32xf32>
    %219 = arith.addf %216, %218 : vector<2x32xf32>
    %220 = math.tanh %219 : vector<2x32xf32>
    %cst_52 = arith.constant 1.000000e+00 : f32
    %221 = vector.broadcast %cst_52 : f32 to vector<2x32xf32>
    %222 = arith.subf %221, %215 : vector<2x32xf32>
    %223 = arith.mulf %222, %220 : vector<2x32xf32>
    %224 = arith.mulf %215, %150 : vector<2x32xf32>
    %225 = arith.addf %223, %224 : vector<2x32xf32>
    %cst_53 = arith.constant dense<0.000000e+00> : vector<2x144xf32>
    %226 = tpu.matmul %225, %12, %cst_53 {dimension_numbers = #tpu.dot_dimension_numbers<[1], [0], [0], [1], [0, 0, 1, 1], [], []>} : vector<2x32xf32>, vector<32x144xf32>, vector<2x144xf32> -> vector<2x144xf32>
    %227 = vector.broadcast %13 : vector<1x144xf32> to vector<2x144xf32>
    %228 = arith.addf %226, %227 : vector<2x144xf32>
    %229 = vector.extract_strided_slice %228 {offsets = [0, 128], sizes = [2, 16], strides = [1, 1]} : vector<2x144xf32> to vector<2x16xf32>
    %c2_i32_54 = arith.constant 2 : i32
    %230 = arith.muli %c2_i32_45, %c2_i32_54 : i32
    %231 = arith.index_cast %230 : i32 to index
    %c0_55 = arith.constant 0 : index
    %232 = vector.load %arg7[%231, %c0_55] : memref<12x16xf32, #tpu.memory_space<vmem>>, vector<2x16xf32>
    tpu.vector_store %arg7[%231, %c0_55], %229 {strides = array<i32>} : memref<12x16xf32, #tpu.memory_space<vmem>>, vector<2x16xf32>,
    %c2_i32_56 = arith.constant 2 : i32
    %233 = arith.muli %c2_i32_45, %c2_i32_56 : i32
    %234 = arith.index_cast %233 : i32 to index
    %c0_57 = arith.constant 0 : index
    %235 = vector.load %arg9[%234, %c0_57] : memref<12x8xf32, #tpu.memory_space<vmem>>, vector<2x8xf32>
    tpu.vector_store %arg9[%234, %c0_57], %194 {strides = array<i32>} : memref<12x8xf32, #tpu.memory_space<vmem>>, vector<2x8xf32>,
    %cst_58 = arith.constant dense<0xFF800000> : vector<2xf32>
    %236 = vector.multi_reduction <maximumf>, %229, %cst_58 [1] : vector<2x16xf32> to vector<2xf32>
    %237 = vector.shape_cast %236 : vector<2xf32> to vector<2x1xf32>
    %238 = vector.broadcast %237 : vector<2x1xf32> to vector<2x16xf32>
    %239 = arith.cmpf oge, %229, %238 : vector<2x16xf32>
    %c16_i32_59 = arith.constant 16 : i32
    %240 = vector.broadcast %c16_i32_59 : i32 to vector<2x16xi32>
    %241 = arith.select %239, %16, %240 : vector<2x16xi1>, vector<2x16xi32>
    %cst_60 = arith.constant dense<2147483647> : vector<2xi32>
    %242 = vector.multi_reduction <minsi>, %241, %cst_60 [1] : vector<2x16xi32> to vector<2xi32>
    %243 = vector.shape_cast %242 : vector<2xi32> to vector<2x1xi32>
    %244 = vector.broadcast %243 : vector<2x1xi32> to vector<2x16xi32>
    %245 = arith.cmpi eq, %244, %16 : vector<2x16xi32>
    %246 = arith.extui %245 : vector<2x16xi1> to vector<2x16xi32>
    %247 = arith.sitofp %246 : vector<2x16xi32> to vector<2x16xf32>
    %cst_61 = arith.constant dense<0.000000e+00> : vector<2x96xf32>
    %248 = tpu.matmul %247, %11, %cst_61 {dimension_numbers = #tpu.dot_dimension_numbers<[1], [0], [0], [1], [0, 0, 1, 1], [], []>} : vector<2x16xf32>, vector<16x96xf32>, vector<2x96xf32> -> vector<2x96xf32>
    %249 = vector.extract_strided_slice %228 {offsets = [0, 0], sizes = [2, 128], strides = [1, 1]} : vector<2x144xf32> to vector<2x128xf32>
    %c3_i32 = arith.constant 3 : i32
    %250 = vector.extract_strided_slice %249 {offsets = [0, 0], sizes = [2, 32], strides = [1, 1]} : vector<2x128xf32> to vector<2x32xf32>
    %251 = vector.extract_strided_slice %249 {offsets = [0, 32], sizes = [2, 96], strides = [1, 1]} : vector<2x128xf32> to vector<2x96xf32>
    %252 = vector.shape_cast %250 : vector<2x32xf32> to vector<2x1x32xf32>
    %253 = vector.broadcast %252 : vector<2x1x32xf32> to vector<2x8x32xf32>
    %254 = arith.addf %253, %9 : vector<2x8x32xf32>
    %255 = math.tanh %254 : vector<2x8x32xf32>
    %256 = vector.shape_cast %15 : vector<32xf32> to vector<1x1x32xf32>
    %257 = vector.broadcast %256 : vector<1x1x32xf32> to vector<2x8x32xf32>
    %258 = arith.mulf %255, %257 : vector<2x8x32xf32>
    %cst_62 = arith.constant dense<0.000000e+00> : vector<2x8xf32>
    %259 = vector.multi_reduction <add>, %258, %cst_62 [2] : vector<2x8x32xf32> to vector<2x8xf32>
    %cst_63 = arith.constant dense<0xFF800000> : vector<2xf32>
    %260 = vector.multi_reduction <maximumf>, %259, %cst_63 [1] : vector<2x8xf32> to vector<2xf32>
    %261 = vector.shape_cast %260 : vector<2xf32> to vector<2x1xf32>
    %262 = vector.broadcast %261 : vector<2x1xf32> to vector<2x8xf32>
    %263 = arith.subf %259, %262 : vector<2x8xf32>
    %264 = math.exp %263 : vector<2x8xf32>
    %cst_64 = arith.constant dense<0.000000e+00> : vector<2xf32>
    %265 = vector.multi_reduction <add>, %264, %cst_64 [1] : vector<2x8xf32> to vector<2xf32>
    %266 = vector.shape_cast %265 : vector<2xf32> to vector<2x1xf32>
    %267 = tpu.reciprocal %266 {approx = true} : vector<2x1xf32> -> vector<2x1xf32>
    %268 = vector.broadcast %267 : vector<2x1xf32> to vector<2x8xf32>
    %269 = arith.mulf %264, %268 : vector<2x8xf32>
    %270 = vector.shape_cast %269 : vector<2x8xf32> to vector<2x8x1xf32>
    %271 = vector.broadcast %270 : vector<2x8x1xf32> to vector<2x8x96xf32>
    %272 = arith.mulf %271, %10 : vector<2x8x96xf32>
    %cst_65 = arith.constant dense<0.000000e+00> : vector<2x96xf32>
    %273 = vector.multi_reduction <add>, %272, %cst_65 [1] : vector<2x8x96xf32> to vector<2x96xf32>
    %274 = arith.addf %248, %273 : vector<2x96xf32>
    %275 = vector.extract_strided_slice %274 {offsets = [0, 0], sizes = [2, 32], strides = [1, 1]} : vector<2x96xf32> to vector<2x32xf32>
    %276 = vector.extract_strided_slice %251 {offsets = [0, 0], sizes = [2, 32], strides = [1, 1]} : vector<2x96xf32> to vector<2x32xf32>
    %277 = arith.addf %275, %276 : vector<2x32xf32>
    %278 = arith.negf %277 : vector<2x32xf32>
    %279 = math.exp %278 : vector<2x32xf32>
    %cst_66 = arith.constant 1.000000e+00 : f32
    %280 = vector.broadcast %cst_66 : f32 to vector<2x32xf32>
    %281 = arith.addf %280, %279 : vector<2x32xf32>
    %282 = arith.divf %280, %281 : vector<2x32xf32>
    %283 = vector.extract_strided_slice %274 {offsets = [0, 32], sizes = [2, 32], strides = [1, 1]} : vector<2x96xf32> to vector<2x32xf32>
    %284 = vector.extract_strided_slice %251 {offsets = [0, 32], sizes = [2, 32], strides = [1, 1]} : vector<2x96xf32> to vector<2x32xf32>
    %285 = arith.addf %283, %284 : vector<2x32xf32>
    %286 = arith.negf %285 : vector<2x32xf32>
    %287 = math.exp %286 : vector<2x32xf32>
    %cst_67 = arith.constant 1.000000e+00 : f32
    %288 = vector.broadcast %cst_67 : f32 to vector<2x32xf32>
    %289 = arith.addf %288, %287 : vector<2x32xf32>
    %290 = arith.divf %288, %289 : vector<2x32xf32>
    %291 = vector.extract_strided_slice %274 {offsets = [0, 64], sizes = [2, 32], strides = [1, 1]} : vector<2x96xf32> to vector<2x32xf32>
    %292 = vector.extract_strided_slice %251 {offsets = [0, 64], sizes = [2, 32], strides = [1, 1]} : vector<2x96xf32> to vector<2x32xf32>
    %293 = arith.mulf %282, %292 : vector<2x32xf32>
    %294 = arith.addf %291, %293 : vector<2x32xf32>
    %295 = math.tanh %294 : vector<2x32xf32>
    %cst_68 = arith.constant 1.000000e+00 : f32
    %296 = vector.broadcast %cst_68 : f32 to vector<2x32xf32>
    %297 = arith.subf %296, %290 : vector<2x32xf32>
    %298 = arith.mulf %297, %295 : vector<2x32xf32>
    %299 = arith.mulf %290, %225 : vector<2x32xf32>
    %300 = arith.addf %298, %299 : vector<2x32xf32>
    %cst_69 = arith.constant dense<0.000000e+00> : vector<2x144xf32>
    %301 = tpu.matmul %300, %12, %cst_69 {dimension_numbers = #tpu.dot_dimension_numbers<[1], [0], [0], [1], [0, 0, 1, 1], [], []>} : vector<2x32xf32>, vector<32x144xf32>, vector<2x144xf32> -> vector<2x144xf32>
    %302 = vector.broadcast %13 : vector<1x144xf32> to vector<2x144xf32>
    %303 = arith.addf %301, %302 : vector<2x144xf32>
    %304 = vector.extract_strided_slice %303 {offsets = [0, 128], sizes = [2, 16], strides = [1, 1]} : vector<2x144xf32> to vector<2x16xf32>
    %c2_i32_70 = arith.constant 2 : i32
    %305 = arith.muli %c3_i32, %c2_i32_70 : i32
    %306 = arith.index_cast %305 : i32 to index
    %c0_71 = arith.constant 0 : index
    %307 = vector.load %arg7[%306, %c0_71] : memref<12x16xf32, #tpu.memory_space<vmem>>, vector<2x16xf32>
    tpu.vector_store %arg7[%306, %c0_71], %304 {strides = array<i32>} : memref<12x16xf32, #tpu.memory_space<vmem>>, vector<2x16xf32>,
    %c2_i32_72 = arith.constant 2 : i32
    %308 = arith.muli %c3_i32, %c2_i32_72 : i32
    %309 = arith.index_cast %308 : i32 to index
    %c0_73 = arith.constant 0 : index
    %310 = vector.load %arg9[%309, %c0_73] : memref<12x8xf32, #tpu.memory_space<vmem>>, vector<2x8xf32>
    tpu.vector_store %arg9[%309, %c0_73], %269 {strides = array<i32>} : memref<12x8xf32, #tpu.memory_space<vmem>>, vector<2x8xf32>,
    %cst_74 = arith.constant dense<0xFF800000> : vector<2xf32>
    %311 = vector.multi_reduction <maximumf>, %304, %cst_74 [1] : vector<2x16xf32> to vector<2xf32>
    %312 = vector.shape_cast %311 : vector<2xf32> to vector<2x1xf32>
    %313 = vector.broadcast %312 : vector<2x1xf32> to vector<2x16xf32>
    %314 = arith.cmpf oge, %304, %313 : vector<2x16xf32>
    %c16_i32_75 = arith.constant 16 : i32
    %315 = vector.broadcast %c16_i32_75 : i32 to vector<2x16xi32>
    %316 = arith.select %314, %16, %315 : vector<2x16xi1>, vector<2x16xi32>
    %cst_76 = arith.constant dense<2147483647> : vector<2xi32>
    %317 = vector.multi_reduction <minsi>, %316, %cst_76 [1] : vector<2x16xi32> to vector<2xi32>
    %318 = vector.shape_cast %317 : vector<2xi32> to vector<2x1xi32>
    %319 = vector.broadcast %318 : vector<2x1xi32> to vector<2x16xi32>
    %320 = arith.cmpi eq, %319, %16 : vector<2x16xi32>
    %321 = arith.extui %320 : vector<2x16xi1> to vector<2x16xi32>
    %322 = arith.sitofp %321 : vector<2x16xi32> to vector<2x16xf32>
    %cst_77 = arith.constant dense<0.000000e+00> : vector<2x96xf32>
    %323 = tpu.matmul %322, %11, %cst_77 {dimension_numbers = #tpu.dot_dimension_numbers<[1], [0], [0], [1], [0, 0, 1, 1], [], []>} : vector<2x16xf32>, vector<16x96xf32>, vector<2x96xf32> -> vector<2x96xf32>
    %324 = vector.extract_strided_slice %303 {offsets = [0, 0], sizes = [2, 128], strides = [1, 1]} : vector<2x144xf32> to vector<2x128xf32>
    %c4_i32 = arith.constant 4 : i32
    %325 = vector.extract_strided_slice %324 {offsets = [0, 0], sizes = [2, 32], strides = [1, 1]} : vector<2x128xf32> to vector<2x32xf32>
    %326 = vector.extract_strided_slice %324 {offsets = [0, 32], sizes = [2, 96], strides = [1, 1]} : vector<2x128xf32> to vector<2x96xf32>
    %327 = vector.shape_cast %325 : vector<2x32xf32> to vector<2x1x32xf32>
    %328 = vector.broadcast %327 : vector<2x1x32xf32> to vector<2x8x32xf32>
    %329 = arith.addf %328, %9 : vector<2x8x32xf32>
    %330 = math.tanh %329 : vector<2x8x32xf32>
    %331 = vector.shape_cast %15 : vector<32xf32> to vector<1x1x32xf32>
    %332 = vector.broadcast %331 : vector<1x1x32xf32> to vector<2x8x32xf32>
    %333 = arith.mulf %330, %332 : vector<2x8x32xf32>
    %cst_78 = arith.constant dense<0.000000e+00> : vector<2x8xf32>
    %334 = vector.multi_reduction <add>, %333, %cst_78 [2] : vector<2x8x32xf32> to vector<2x8xf32>
    %cst_79 = arith.constant dense<0xFF800000> : vector<2xf32>
    %335 = vector.multi_reduction <maximumf>, %334, %cst_79 [1] : vector<2x8xf32> to vector<2xf32>
    %336 = vector.shape_cast %335 : vector<2xf32> to vector<2x1xf32>
    %337 = vector.broadcast %336 : vector<2x1xf32> to vector<2x8xf32>
    %338 = arith.subf %334, %337 : vector<2x8xf32>
    %339 = math.exp %338 : vector<2x8xf32>
    %cst_80 = arith.constant dense<0.000000e+00> : vector<2xf32>
    %340 = vector.multi_reduction <add>, %339, %cst_80 [1] : vector<2x8xf32> to vector<2xf32>
    %341 = vector.shape_cast %340 : vector<2xf32> to vector<2x1xf32>
    %342 = tpu.reciprocal %341 {approx = true} : vector<2x1xf32> -> vector<2x1xf32>
    %343 = vector.broadcast %342 : vector<2x1xf32> to vector<2x8xf32>
    %344 = arith.mulf %339, %343 : vector<2x8xf32>
    %345 = vector.shape_cast %344 : vector<2x8xf32> to vector<2x8x1xf32>
    %346 = vector.broadcast %345 : vector<2x8x1xf32> to vector<2x8x96xf32>
    %347 = arith.mulf %346, %10 : vector<2x8x96xf32>
    %cst_81 = arith.constant dense<0.000000e+00> : vector<2x96xf32>
    %348 = vector.multi_reduction <add>, %347, %cst_81 [1] : vector<2x8x96xf32> to vector<2x96xf32>
    %349 = arith.addf %323, %348 : vector<2x96xf32>
    %350 = vector.extract_strided_slice %349 {offsets = [0, 0], sizes = [2, 32], strides = [1, 1]} : vector<2x96xf32> to vector<2x32xf32>
    %351 = vector.extract_strided_slice %326 {offsets = [0, 0], sizes = [2, 32], strides = [1, 1]} : vector<2x96xf32> to vector<2x32xf32>
    %352 = arith.addf %350, %351 : vector<2x32xf32>
    %353 = arith.negf %352 : vector<2x32xf32>
    %354 = math.exp %353 : vector<2x32xf32>
    %cst_82 = arith.constant 1.000000e+00 : f32
    %355 = vector.broadcast %cst_82 : f32 to vector<2x32xf32>
    %356 = arith.addf %355, %354 : vector<2x32xf32>
    %357 = arith.divf %355, %356 : vector<2x32xf32>
    %358 = vector.extract_strided_slice %349 {offsets = [0, 32], sizes = [2, 32], strides = [1, 1]} : vector<2x96xf32> to vector<2x32xf32>
    %359 = vector.extract_strided_slice %326 {offsets = [0, 32], sizes = [2, 32], strides = [1, 1]} : vector<2x96xf32> to vector<2x32xf32>
    %360 = arith.addf %358, %359 : vector<2x32xf32>
    %361 = arith.negf %360 : vector<2x32xf32>
    %362 = math.exp %361 : vector<2x32xf32>
    %cst_83 = arith.constant 1.000000e+00 : f32
    %363 = vector.broadcast %cst_83 : f32 to vector<2x32xf32>
    %364 = arith.addf %363, %362 : vector<2x32xf32>
    %365 = arith.divf %363, %364 : vector<2x32xf32>
    %366 = vector.extract_strided_slice %349 {offsets = [0, 64], sizes = [2, 32], strides = [1, 1]} : vector<2x96xf32> to vector<2x32xf32>
    %367 = vector.extract_strided_slice %326 {offsets = [0, 64], sizes = [2, 32], strides = [1, 1]} : vector<2x96xf32> to vector<2x32xf32>
    %368 = arith.mulf %357, %367 : vector<2x32xf32>
    %369 = arith.addf %366, %368 : vector<2x32xf32>
    %370 = math.tanh %369 : vector<2x32xf32>
    %cst_84 = arith.constant 1.000000e+00 : f32
    %371 = vector.broadcast %cst_84 : f32 to vector<2x32xf32>
    %372 = arith.subf %371, %365 : vector<2x32xf32>
    %373 = arith.mulf %372, %370 : vector<2x32xf32>
    %374 = arith.mulf %365, %300 : vector<2x32xf32>
    %375 = arith.addf %373, %374 : vector<2x32xf32>
    %cst_85 = arith.constant dense<0.000000e+00> : vector<2x144xf32>
    %376 = tpu.matmul %375, %12, %cst_85 {dimension_numbers = #tpu.dot_dimension_numbers<[1], [0], [0], [1], [0, 0, 1, 1], [], []>} : vector<2x32xf32>, vector<32x144xf32>, vector<2x144xf32> -> vector<2x144xf32>
    %377 = vector.broadcast %13 : vector<1x144xf32> to vector<2x144xf32>
    %378 = arith.addf %376, %377 : vector<2x144xf32>
    %379 = vector.extract_strided_slice %378 {offsets = [0, 128], sizes = [2, 16], strides = [1, 1]} : vector<2x144xf32> to vector<2x16xf32>
    %c2_i32_86 = arith.constant 2 : i32
    %380 = arith.muli %c4_i32, %c2_i32_86 : i32
    %381 = arith.index_cast %380 : i32 to index
    %c0_87 = arith.constant 0 : index
    %382 = vector.load %arg7[%381, %c0_87] : memref<12x16xf32, #tpu.memory_space<vmem>>, vector<2x16xf32>
    tpu.vector_store %arg7[%381, %c0_87], %379 {strides = array<i32>} : memref<12x16xf32, #tpu.memory_space<vmem>>, vector<2x16xf32>,
    %c2_i32_88 = arith.constant 2 : i32
    %383 = arith.muli %c4_i32, %c2_i32_88 : i32
    %384 = arith.index_cast %383 : i32 to index
    %c0_89 = arith.constant 0 : index
    %385 = vector.load %arg9[%384, %c0_89] : memref<12x8xf32, #tpu.memory_space<vmem>>, vector<2x8xf32>
    tpu.vector_store %arg9[%384, %c0_89], %344 {strides = array<i32>} : memref<12x8xf32, #tpu.memory_space<vmem>>, vector<2x8xf32>,
    %cst_90 = arith.constant dense<0xFF800000> : vector<2xf32>
    %386 = vector.multi_reduction <maximumf>, %379, %cst_90 [1] : vector<2x16xf32> to vector<2xf32>
    %387 = vector.shape_cast %386 : vector<2xf32> to vector<2x1xf32>
    %388 = vector.broadcast %387 : vector<2x1xf32> to vector<2x16xf32>
    %389 = arith.cmpf oge, %379, %388 : vector<2x16xf32>
    %c16_i32_91 = arith.constant 16 : i32
    %390 = vector.broadcast %c16_i32_91 : i32 to vector<2x16xi32>
    %391 = arith.select %389, %16, %390 : vector<2x16xi1>, vector<2x16xi32>
    %cst_92 = arith.constant dense<2147483647> : vector<2xi32>
    %392 = vector.multi_reduction <minsi>, %391, %cst_92 [1] : vector<2x16xi32> to vector<2xi32>
    %393 = vector.shape_cast %392 : vector<2xi32> to vector<2x1xi32>
    %394 = vector.broadcast %393 : vector<2x1xi32> to vector<2x16xi32>
    %395 = arith.cmpi eq, %394, %16 : vector<2x16xi32>
    %396 = arith.extui %395 : vector<2x16xi1> to vector<2x16xi32>
    %397 = arith.sitofp %396 : vector<2x16xi32> to vector<2x16xf32>
    %cst_93 = arith.constant dense<0.000000e+00> : vector<2x96xf32>
    %398 = tpu.matmul %397, %11, %cst_93 {dimension_numbers = #tpu.dot_dimension_numbers<[1], [0], [0], [1], [0, 0, 1, 1], [], []>} : vector<2x16xf32>, vector<16x96xf32>, vector<2x96xf32> -> vector<2x96xf32>
    %399 = vector.extract_strided_slice %378 {offsets = [0, 0], sizes = [2, 128], strides = [1, 1]} : vector<2x144xf32> to vector<2x128xf32>
    %c5_i32 = arith.constant 5 : i32
    %400 = vector.extract_strided_slice %399 {offsets = [0, 0], sizes = [2, 32], strides = [1, 1]} : vector<2x128xf32> to vector<2x32xf32>
    %401 = vector.extract_strided_slice %399 {offsets = [0, 32], sizes = [2, 96], strides = [1, 1]} : vector<2x128xf32> to vector<2x96xf32>
    %402 = vector.shape_cast %400 : vector<2x32xf32> to vector<2x1x32xf32>
    %403 = vector.broadcast %402 : vector<2x1x32xf32> to vector<2x8x32xf32>
    %404 = arith.addf %403, %9 : vector<2x8x32xf32>
    %405 = math.tanh %404 : vector<2x8x32xf32>
    %406 = vector.shape_cast %15 : vector<32xf32> to vector<1x1x32xf32>
    %407 = vector.broadcast %406 : vector<1x1x32xf32> to vector<2x8x32xf32>
    %408 = arith.mulf %405, %407 : vector<2x8x32xf32>
    %cst_94 = arith.constant dense<0.000000e+00> : vector<2x8xf32>
    %409 = vector.multi_reduction <add>, %408, %cst_94 [2] : vector<2x8x32xf32> to vector<2x8xf32>
    %cst_95 = arith.constant dense<0xFF800000> : vector<2xf32>
    %410 = vector.multi_reduction <maximumf>, %409, %cst_95 [1] : vector<2x8xf32> to vector<2xf32>
    %411 = vector.shape_cast %410 : vector<2xf32> to vector<2x1xf32>
    %412 = vector.broadcast %411 : vector<2x1xf32> to vector<2x8xf32>
    %413 = arith.subf %409, %412 : vector<2x8xf32>
    %414 = math.exp %413 : vector<2x8xf32>
    %cst_96 = arith.constant dense<0.000000e+00> : vector<2xf32>
    %415 = vector.multi_reduction <add>, %414, %cst_96 [1] : vector<2x8xf32> to vector<2xf32>
    %416 = vector.shape_cast %415 : vector<2xf32> to vector<2x1xf32>
    %417 = tpu.reciprocal %416 {approx = true} : vector<2x1xf32> -> vector<2x1xf32>
    %418 = vector.broadcast %417 : vector<2x1xf32> to vector<2x8xf32>
    %419 = arith.mulf %414, %418 : vector<2x8xf32>
    %420 = vector.shape_cast %419 : vector<2x8xf32> to vector<2x8x1xf32>
    %421 = vector.broadcast %420 : vector<2x8x1xf32> to vector<2x8x96xf32>
    %422 = arith.mulf %421, %10 : vector<2x8x96xf32>
    %cst_97 = arith.constant dense<0.000000e+00> : vector<2x96xf32>
    %423 = vector.multi_reduction <add>, %422, %cst_97 [1] : vector<2x8x96xf32> to vector<2x96xf32>
    %424 = arith.addf %398, %423 : vector<2x96xf32>
    %425 = vector.extract_strided_slice %424 {offsets = [0, 0], sizes = [2, 32], strides = [1, 1]} : vector<2x96xf32> to vector<2x32xf32>
    %426 = vector.extract_strided_slice %401 {offsets = [0, 0], sizes = [2, 32], strides = [1, 1]} : vector<2x96xf32> to vector<2x32xf32>
    %427 = arith.addf %425, %426 : vector<2x32xf32>
    %428 = arith.negf %427 : vector<2x32xf32>
    %429 = math.exp %428 : vector<2x32xf32>
    %cst_98 = arith.constant 1.000000e+00 : f32
    %430 = vector.broadcast %cst_98 : f32 to vector<2x32xf32>
    %431 = arith.addf %430, %429 : vector<2x32xf32>
    %432 = arith.divf %430, %431 : vector<2x32xf32>
    %433 = vector.extract_strided_slice %424 {offsets = [0, 32], sizes = [2, 32], strides = [1, 1]} : vector<2x96xf32> to vector<2x32xf32>
    %434 = vector.extract_strided_slice %401 {offsets = [0, 32], sizes = [2, 32], strides = [1, 1]} : vector<2x96xf32> to vector<2x32xf32>
    %435 = arith.addf %433, %434 : vector<2x32xf32>
    %436 = arith.negf %435 : vector<2x32xf32>
    %437 = math.exp %436 : vector<2x32xf32>
    %cst_99 = arith.constant 1.000000e+00 : f32
    %438 = vector.broadcast %cst_99 : f32 to vector<2x32xf32>
    %439 = arith.addf %438, %437 : vector<2x32xf32>
    %440 = arith.divf %438, %439 : vector<2x32xf32>
    %441 = vector.extract_strided_slice %424 {offsets = [0, 64], sizes = [2, 32], strides = [1, 1]} : vector<2x96xf32> to vector<2x32xf32>
    %442 = vector.extract_strided_slice %401 {offsets = [0, 64], sizes = [2, 32], strides = [1, 1]} : vector<2x96xf32> to vector<2x32xf32>
    %443 = arith.mulf %432, %442 : vector<2x32xf32>
    %444 = arith.addf %441, %443 : vector<2x32xf32>
    %445 = math.tanh %444 : vector<2x32xf32>
    %cst_100 = arith.constant 1.000000e+00 : f32
    %446 = vector.broadcast %cst_100 : f32 to vector<2x32xf32>
    %447 = arith.subf %446, %440 : vector<2x32xf32>
    %448 = arith.mulf %447, %445 : vector<2x32xf32>
    %449 = arith.mulf %440, %375 : vector<2x32xf32>
    %450 = arith.addf %448, %449 : vector<2x32xf32>
    %cst_101 = arith.constant dense<0.000000e+00> : vector<2x144xf32>
    %451 = tpu.matmul %450, %12, %cst_101 {dimension_numbers = #tpu.dot_dimension_numbers<[1], [0], [0], [1], [0, 0, 1, 1], [], []>} : vector<2x32xf32>, vector<32x144xf32>, vector<2x144xf32> -> vector<2x144xf32>
    %452 = vector.broadcast %13 : vector<1x144xf32> to vector<2x144xf32>
    %453 = arith.addf %451, %452 : vector<2x144xf32>
    %454 = vector.extract_strided_slice %453 {offsets = [0, 128], sizes = [2, 16], strides = [1, 1]} : vector<2x144xf32> to vector<2x16xf32>
    %c2_i32_102 = arith.constant 2 : i32
    %455 = arith.muli %c5_i32, %c2_i32_102 : i32
    %456 = arith.index_cast %455 : i32 to index
    %c0_103 = arith.constant 0 : index
    %457 = vector.load %arg7[%456, %c0_103] : memref<12x16xf32, #tpu.memory_space<vmem>>, vector<2x16xf32>
    tpu.vector_store %arg7[%456, %c0_103], %454 {strides = array<i32>} : memref<12x16xf32, #tpu.memory_space<vmem>>, vector<2x16xf32>,
    %c2_i32_104 = arith.constant 2 : i32
    %458 = arith.muli %c5_i32, %c2_i32_104 : i32
    %459 = arith.index_cast %458 : i32 to index
    %c0_105 = arith.constant 0 : index
    %460 = vector.load %arg9[%459, %c0_105] : memref<12x8xf32, #tpu.memory_space<vmem>>, vector<2x8xf32>
    tpu.vector_store %arg9[%459, %c0_105], %419 {strides = array<i32>} : memref<12x8xf32, #tpu.memory_space<vmem>>, vector<2x8xf32>,
    %cst_106 = arith.constant dense<0xFF800000> : vector<2xf32>
    %461 = vector.multi_reduction <maximumf>, %454, %cst_106 [1] : vector<2x16xf32> to vector<2xf32>
    %462 = vector.shape_cast %461 : vector<2xf32> to vector<2x1xf32>
    %463 = vector.broadcast %462 : vector<2x1xf32> to vector<2x16xf32>
    %464 = arith.cmpf oge, %454, %463 : vector<2x16xf32>
    %c16_i32_107 = arith.constant 16 : i32
    %465 = vector.broadcast %c16_i32_107 : i32 to vector<2x16xi32>
    %466 = arith.select %464, %16, %465 : vector<2x16xi1>, vector<2x16xi32>
    %cst_108 = arith.constant dense<2147483647> : vector<2xi32>
    %467 = vector.multi_reduction <minsi>, %466, %cst_108 [1] : vector<2x16xi32> to vector<2xi32>
    %468 = vector.shape_cast %467 : vector<2xi32> to vector<2x1xi32>
    %469 = vector.broadcast %468 : vector<2x1xi32> to vector<2x16xi32>
    %470 = arith.cmpi eq, %469, %16 : vector<2x16xi32>
    %471 = arith.extui %470 : vector<2x16xi1> to vector<2x16xi32>
    %472 = arith.sitofp %471 : vector<2x16xi32> to vector<2x16xf32>
    %cst_109 = arith.constant dense<0.000000e+00> : vector<2x96xf32>
    %473 = tpu.matmul %472, %11, %cst_109 {dimension_numbers = #tpu.dot_dimension_numbers<[1], [0], [0], [1], [0, 0, 1, 1], [], []>} : vector<2x16xf32>, vector<16x96xf32>, vector<2x96xf32> -> vector<2x96xf32>
    %474 = vector.extract_strided_slice %453 {offsets = [0, 0], sizes = [2, 128], strides = [1, 1]} : vector<2x144xf32> to vector<2x128xf32>
    %c6_i32 = arith.constant 6 : i32
    %c0_110 = arith.constant 0 : index
    %c0_111 = arith.constant 0 : index
    %475 = vector.load %arg8[%c0_110, %c0_111] : memref<2x32xf32, #tpu.memory_space<vmem>>, vector<2x32xf32>
    tpu.vector_store %arg8[%c0_110, %c0_111], %450 {strides = array<i32>} : memref<2x32xf32, #tpu.memory_space<vmem>>, vector<2x32xf32>,
    return
  }
}

</mosaic_0001>

<llo_original>
// kernel: tpu_custom_call.1
$region0: #{tpu_custom_call.1}
  #allocation0 [shape = 'u32[]', space=smem, size = 0x4, offset = 0x4, fixed_abs, tag = 'smem constant byte address 0x4 - core index']
  #allocation1 [shape = 'u32[144,128]{1,0:T(1,128)}', space=vmem, size = 0x12000, scoped, tag = 'internal scratch']
  %s0 = inlined_call_operand.hbm [shape: f32[2,8,64], index: 0, kind: input, shape index: {}]
  %s1 = inlined_call_operand.vmem [shape: f32[2,32], index: 1, kind: input, shape index: {}]
  %s2 = inlined_call_operand.hbm [shape: f32[16,96], index: 2, kind: input, shape index: {}]
  %s3 = inlined_call_operand.hbm [shape: f32[32,144], index: 3, kind: input, shape index: {}]
  %s4 = inlined_call_operand.vmem [shape: f32[1,144], index: 4, kind: input, shape index: {}]
  %s5 = inlined_call_operand.hbm [shape: f32[64,128], index: 5, kind: input, shape index: {}]
  %s6 = inlined_call_operand.vmem [shape: f32[2,128], index: 6, kind: input, shape index: {}]
  %s7 = inlined_call_operand.hbm [shape: f32[12,16], index: 7, kind: output, shape index: {0}]
  %s8 = inlined_call_operand.hbm [shape: f32[2,32], index: 8, kind: output, shape index: {1}]
  %s9 = inlined_call_operand.vmem [shape: f32[12,8], index: 9, kind: output, shape index: {2}]
  %10 = xla_tuple %s7, %s8, %s9
  %s11 = sld [smem:[#allocation0]]
  $region70: #{tpu_custom_call.1} parent=0
    _
  %s13 = ssub.s32 1, %s11
  %s14 = scalar_select 0, %s13, %s11
  $region1: #{tpu_custom_call.1} parent=0
    #allocation2 [shape = 'u8[8192]{0}', space=vmem, size = 0x2000, scoped, tag = 'input window, operand 0, single buffered']
    #allocation3 [shape = 's32[1]{0}', space=sflag, size = 0x4, scoped, tag = 'scoped memory for tpu_custom_call.1']
    #allocation4 [shape = 's32[1]{0}', space=sflag, size = 0x4, scoped, tag = 'scoped memory for tpu_custom_call.1']
    #allocation5 [shape = 'u8[8192]{0}', space=vmem, size = 0x2000, scoped, tag = 'input window, operand 2, single buffered']
    #allocation6 [shape = 's32[1]{0}', space=sflag, size = 0x4, scoped, tag = 'scoped memory for tpu_custom_call.1']
    #allocation7 [shape = 'u8[32768]{0}', space=vmem, size = 0x8000, scoped, tag = 'input window, operand 3, single buffered']
    #allocation8 [shape = 'u8[32768]{0}', space=vmem, size = 0x8000, scoped, tag = 'input window, operand 5, single buffered']
    #allocation9 [shape = 's32[1]{0}', space=sflag, size = 0x4, scoped, tag = 'scoped memory for tpu_custom_call.1']
    #allocation10 [shape = 'u8[8192]{0}', space=vmem, size = 0x2000, scoped, tag = 'output window, operand 0, single buffered']
    #allocation11 [shape = 'u8[1024]{0}', space=vmem, size = 0x400, scoped, tag = 'output window, operand 1, single buffered']
    #allocation12 [shape = 's32[1]{0}', space=sflag, size = 0x4, scoped, tag = 'scoped memory for tpu_custom_call.1']
    %15 = vsyncpa [#allocation3], 0
    %16 = vsyncpa [#allocation6], 0
    %17 = vsyncpa [#allocation9], 0
    %18 = vsyncpa [#allocation4], 0
    %19 = vsyncpa [#allocation12], 0
    // Predicated region
    $region2: #{tpu_custom_call.1} parent=1 // pred_check
      _
    $region3: #{tpu_custom_call.1} parent=1 // pred_check_branch
      %21 = sbr.rel (0) target = $region5
    $region4: #{tpu_custom_call.1} parent=1 // pred_region
      %s23 = ssub.s32 256, 256
      %24 = vsyncadd [#allocation3], %s23
      %s25 = sshll.u32 [#allocation2], 4
      %s26 = int_to_ptr.vmem [resolvable:$true] %s25
      %31 = dma.hbm_to_vmem [thread:$0]  %s0, 256, %s26, [#allocation3], 128, 128, 8
    $region5: #{tpu_custom_call.1} parent=1 // pred_fallthru
      _
    // Predicated region
    $region6: #{tpu_custom_call.1} parent=1 // pred_check
      _
    $region7: #{tpu_custom_call.1} parent=1 // pred_check_branch
      %33 = sbr.rel (0) target = $region9
    $region8: #{tpu_custom_call.1} parent=1 // pred_region
      _
    $region9: #{tpu_custom_call.1} parent=1 // pred_fallthru
      _
    // Predicated region
    $region10: #{tpu_custom_call.1} parent=1 // pred_check
      _
    $region11: #{tpu_custom_call.1} parent=1 // pred_check_branch
      %35 = sbr.rel (0) target = $region13
    $region12: #{tpu_custom_call.1} parent=1 // pred_region
      %s37 = ssub.s32 256, 256
      %38 = vsyncadd [#allocation6], %s37
      %s39 = sshll.u32 [#allocation5], 4
      %s40 = int_to_ptr.vmem [resolvable:$true] %s39
      %45 = dma.hbm_to_vmem [thread:$0]  %s2, 256, %s40, [#allocation6], 128, 128, 8
    $region13: #{tpu_custom_call.1} parent=1 // pred_fallthru
      _
    // Predicated region
    $region14: #{tpu_custom_call.1} parent=1 // pred_check
      _
    $region15: #{tpu_custom_call.1} parent=1 // pred_check_branch
      %47 = sbr.rel (0) target = $region17
    $region16: #{tpu_custom_call.1} parent=1 // pred_region
      %s49 = ssub.s32 1024, 1024
      %50 = vsyncadd [#allocation6], %s49
      %s51 = sshll.u32 [#allocation7], 4
      %s52 = int_to_ptr.vmem [resolvable:$true] %s51
      %57 = dma.hbm_to_vmem [thread:$0]  %s3, 1024, %s52, [#allocation6], 256, 256, 16
    $region17: #{tpu_custom_call.1} parent=1 // pred_fallthru
      _
    // Predicated region
    $region18: #{tpu_custom_call.1} parent=1 // pred_check
      _
    $region19: #{tpu_custom_call.1} parent=1 // pred_check_branch
      %59 = sbr.rel (0) target = $region21
    $region20: #{tpu_custom_call.1} parent=1 // pred_region
      _
    $region21: #{tpu_custom_call.1} parent=1 // pred_fallthru
      _
    // Predicated region
    $region22: #{tpu_custom_call.1} parent=1 // pred_check
      _
    $region23: #{tpu_custom_call.1} parent=1 // pred_check_branch
      %61 = sbr.rel (0) target = $region25
    $region24: #{tpu_custom_call.1} parent=1 // pred_region
      %s63 = ssub.s32 1024, 1024
      %64 = vsyncadd [#allocation9], %s63
      %s65 = sshll.u32 [#allocation8], 4
      %s66 = int_to_ptr.vmem [resolvable:$true] %s65
      %71 = dma.hbm_to_vmem [thread:$0]  %s5, 1024, %s66, [#allocation9], 128, 128, 8
    $region25: #{tpu_custom_call.1} parent=1 // pred_fallthru
      _
    // Predicated region
    $region26: #{tpu_custom_call.1} parent=1 // pred_check
      _
    $region27: #{tpu_custom_call.1} parent=1 // pred_check_branch
      %73 = sbr.rel (0) target = $region29
    $region28: #{tpu_custom_call.1} parent=1 // pred_region
      _
    $region29: #{tpu_custom_call.1} parent=1 // pred_fallthru
      _
    // Predicated region
    $region30: #{tpu_custom_call.1} parent=1 // pred_check
      _
    $region31: #{tpu_custom_call.1} parent=1 // pred_check_branch
      %75 = sbr.rel (0) target = $region33
    $region32: #{tpu_custom_call.1} parent=1 // pred_region
      %76 = dma.done [#allocation3], 256
    $region33: #{tpu_custom_call.1} parent=1 // pred_fallthru
      _
    // Predicated region
    $region34: #{tpu_custom_call.1} parent=1 // pred_check
      _
    $region35: #{tpu_custom_call.1} parent=1 // pred_check_branch
      %78 = sbr.rel (0) target = $region37
    $region36: #{tpu_custom_call.1} parent=1 // pred_region
      %79 = dma.done [#allocation6], 256
    $region37: #{tpu_custom_call.1} parent=1 // pred_fallthru
      _
    // Predicated region
    $region38: #{tpu_custom_call.1} parent=1 // pred_check
      _
    $region39: #{tpu_custom_call.1} parent=1 // pred_check_branch
      %81 = sbr.rel (0) target = $region41
    $region40: #{tpu_custom_call.1} parent=1 // pred_region
      %82 = dma.done [#allocation6], 1024
    $region41: #{tpu_custom_call.1} parent=1 // pred_fallthru
      _
    // Predicated region
    $region42: #{tpu_custom_call.1} parent=1 // pred_check
      _
    $region43: #{tpu_custom_call.1} parent=1 // pred_check_branch
      %84 = sbr.rel (0) target = $region45
    $region44: #{tpu_custom_call.1} parent=1 // pred_region
      %85 = dma.done [#allocation9], 1024
    $region45: #{tpu_custom_call.1} parent=1 // pred_fallthru
      _
    %v86 = vld [vmem:[#allocation2] sm:$0xff]
    %v87 = vld [vmem:[#allocation2 + $0x8] sm:$0xff]
    %v88 = vld [vmem:[%s6] sm:$0x3]
    %v89 = vld [vmem:[#allocation8] sm:$0xff]
    %v90 = vld [vmem:[#allocation8 + $0x8] sm:$0xff]
    %v91 = vld [vmem:[#allocation8 + $0x10] sm:$0xff]
    %v92 = vld [vmem:[#allocation8 + $0x18] sm:$0xff]
    %v93 = vld [vmem:[#allocation8 + $0x20] sm:$0xff]
    %v94 = vld [vmem:[#allocation8 + $0x28] sm:$0xff]
    %v95 = vld [vmem:[#allocation8 + $0x30] sm:$0xff]
    %v96 = vld [vmem:[#allocation8 + $0x38] sm:$0xff]
    %v97 = vlaneseq
    %v98 = vshrl.u32 %v97, 7
    %v99 = vsub.s32 0, %v98
    %v100 = vrot.slane %v88, %v99
    %vm101 = vcmask 523264
    %v103 = vsel %vm101, %v86, 0
    %v106 = vsel %vm101, %v87, 0
    %108 = vmatprep.subr.mxu0 0.0
    %109 = vmatpush1.msra.mxu0 %v89
    %110 = vmatprep.subr.mxu0 0.0
    %111 = vmatpush1.msra.mxu0 %v90
    %112 = vmatprep.subr.mxu0 0.0
    %113 = vmatpush1.msra.mxu0 %v91
    %114 = vmatprep.subr.mxu0 0.0
    %115 = vmatpush1.msra.mxu0 %v92
    %116 = vmatprep.subr.mxu0 0.0
    %117 = vmatpush1.msra.mxu0 %v93
    %118 = vmatprep.subr.mxu0 0.0
    %119 = vmatpush1.msra.mxu0 %v94
    %120 = vmatprep.subr.mxu0 0.0
    %121 = vmatpush1.msra.mxu0 %v95
    %122 = vmatprep.subr.mxu0 0.0
    %123 = vmatpush1.msra.mxu0 %v96
    %124 = vmatprep.subr.mxu0 0.0
    %125 = vmatpush1.msra.mxu0 0.0
    %126 = vmatprep.subr.mxu0 0.0
    %127 = vmatpush1.msra.mxu0 0.0
    %128 = vmatprep.subr.mxu0 0.0
    %129 = vmatpush1.msra.mxu0 0.0
    %130 = vmatprep.subr.mxu0 0.0
    %131 = vmatpush1.msra.mxu0 0.0
    %132 = vmatprep.subr.mxu0 0.0
    %133 = vmatpush1.msra.mxu0 0.0
    %134 = vmatprep.subr.mxu0 0.0
    %135 = vmatpush1.msra.mxu0 0.0
    %136 = vmatprep.subr.mxu0 0.0
    %137 = vmatpush1.msra.mxu0 0.0
    %138 = vmatprep.subr.mxu0 0.0
    %139 = vmatpush1.msra.mxu0 0.0
    %140 = vmatprep.subr.mxu0 0.0
    %141 = vmatpush1.msra.mxu0 0.0
    %142 = vmatprep.subr.mxu0 0.0
    %143 = vmatpush1.msra.mxu0 0.0
    %144 = vmatprep.subr.mxu0 0.0
    %145 = vmatpush1.msra.mxu0 0.0
    %146 = vmatprep.subr.mxu0 0.0
    %147 = vmatpush1.msra.mxu0 0.0
    %148 = vmatprep.subr.mxu0 0.0
    %149 = vmatpush1.msra.mxu0 0.0
    %150 = vmatprep.subr.mxu0 0.0
    %151 = vmatpush1.msra.mxu0 0.0
    %152 = vmatprep.subr.mxu0 0.0
    %153 = vmatpush1.msra.mxu0 0.0
    %154 = vmatprep.subr.mxu0 0.0
    %155 = vmatpush1.msra.mxu0 0.0
    %156 = vmatprep.subr.mxu0 0.0
    %157 = vmatpush1.msra.mxu0 0.0
    %158 = vmatprep.subr.mxu0 0.0
    %159 = vmatpush1.msra.mxu0 0.0
    %160 = vmatprep.subr.mxu0 0.0
    %161 = vmatpush1.msra.mxu0 0.0
    %162 = vmatprep.subr.mxu0 0.0
    %163 = vmatpush1.msra.mxu0 0.0
    %164 = vmatprep.subr.mxu0 0.0
    %165 = vmatpush1.msra.mxu0 0.0
    %166 = vmatprep.subr.mxu0 0.0
    %167 = vmatpush1.msra.mxu0 0.0
    %168 = vmatprep.subr.mxu0 0.0
    %169 = vmatpush1.msra.mxu0 0.0
    %170 = vmatprep.subr.mxu0 0.0
    %171 = vmatpush1.msra.mxu0 0.0
    %172 = vmatprep.mubr.f32.mxu0 0.0
    %173 = vmatmul.mubr.f32.gmra.mrb[0].mxu0 %v103
    %v174 = vpop.f32.mrb[0].mxu0
    %v175 = vadd.f32 %v100, %v174
    %v176 = vpop.f32.mrb[0].mxu0
    %177 = vmatprep.mubr.f32.mxu0 0.0
    %178 = vmatmul.mubr.f32.gmra.mrb[0].mxu0 %v106
    %v179 = vpop.f32.mrb[0].mxu0
    %v180 = vadd.f32 %v100, %v179
    %v181 = vpop.f32.mrb[0].mxu0
    %182 = vdwg.mxu0
    %v183 = vld [vmem:[#allocation5] sm:$0xff]
    %v184 = vld [vmem:[#allocation5 + $0x8] sm:$0xff]
    %v185 = vld [vmem:[#allocation7] sm:$0xff]
    %v186 = vld [vmem:[#allocation7 + $0x8] sm:$0xff]
    %v187 = vld [vmem:[#allocation7 + $0x10] sm:$0xff]
    %v188 = vld [vmem:[#allocation7 + $0x18] sm:$0xff]
    %v189 = vld [vmem:[#allocation7 + $0x20] sm:$0xff]
    %v190 = vld [vmem:[#allocation7 + $0x28] sm:$0xff]
    %v191 = vld [vmem:[#allocation7 + $0x30] sm:$0xff]
    %v192 = vld [vmem:[#allocation7 + $0x38] sm:$0xff]
    %v193 = vld [vmem:[%s4] sm:$0x3]
    %v194 = vlaneseq
    %v195 = vand.u32 %v194, 127
    %v196 = vld [vmem:[%s1] sm:$0x3]
    %v198 = vlaneseq
    %v199 = vshrl.u32 %v198, 7
    %v200 = vsub.s32 0, %v199
    %v201 = vrot.slane %v193, %v200
    %v202 = vlaneseq
    %v203 = vshrl.u32 %v202, 7
    %v204 = vsub.s32 1, %v203
    %v205 = vrot.slane %v193, %v204
    %vm208 = vcmask 261120
    %v210 = vsel %vm208, %v196, 0
    %212 = vmatprep.subr.mxu0 %v186
    %213 = vmatpush1.msra.mxu0 %v185
    %214 = vmatprep.subr.mxu0 %v188
    %215 = vmatpush1.msra.mxu0 %v187
    %216 = vmatprep.subr.mxu0 %v190
    %217 = vmatpush1.msra.mxu0 %v189
    %218 = vmatprep.subr.mxu0 %v192
    %219 = vmatpush1.msra.mxu0 %v191
    %220 = vmatprep.subr.mxu0 0.0
    %221 = vmatpush1.msra.mxu0 0.0
    %222 = vmatprep.subr.mxu0 0.0
    %223 = vmatpush1.msra.mxu0 0.0
    %224 = vmatprep.subr.mxu0 0.0
    %225 = vmatpush1.msra.mxu0 0.0
    %226 = vmatprep.subr.mxu0 0.0
    %227 = vmatpush1.msra.mxu0 0.0
    %228 = vmatprep.subr.mxu0 0.0
    %229 = vmatpush1.msra.mxu0 0.0
    %230 = vmatprep.subr.mxu0 0.0
    %231 = vmatpush1.msra.mxu0 0.0
    %232 = vmatprep.subr.mxu0 0.0
    %233 = vmatpush1.msra.mxu0 0.0
    %234 = vmatprep.subr.mxu0 0.0
    %235 = vmatpush1.msra.mxu0 0.0
    %236 = vmatprep.subr.mxu0 0.0
    %237 = vmatpush1.msra.mxu0 0.0
    %238 = vmatprep.subr.mxu0 0.0
    %239 = vmatpush1.msra.mxu0 0.0
    %240 = vmatprep.subr.mxu0 0.0
    %241 = vmatpush1.msra.mxu0 0.0
    %242 = vmatprep.subr.mxu0 0.0
    %243 = vmatpush1.msra.mxu0 0.0
    %244 = vmatprep.subr.mxu0 0.0
    %245 = vmatpush1.msra.mxu0 0.0
    %246 = vmatprep.subr.mxu0 0.0
    %247 = vmatpush1.msra.mxu0 0.0
    %248 = vmatprep.subr.mxu0 0.0
    %249 = vmatpush1.msra.mxu0 0.0
    %250 = vmatprep.subr.mxu0 0.0
    %251 = vmatpush1.msra.mxu0 0.0
    %252 = vmatprep.subr.mxu0 0.0
    %253 = vmatpush1.msra.mxu0 0.0
    %254 = vmatprep.subr.mxu0 0.0
    %255 = vmatpush1.msra.mxu0 0.0
    %256 = vmatprep.subr.mxu0 0.0
    %257 = vmatpush1.msra.mxu0 0.0
    %258 = vmatprep.subr.mxu0 0.0
    %259 = vmatpush1.msra.mxu0 0.0
    %260 = vmatprep.subr.mxu0 0.0
    %261 = vmatpush1.msra.mxu0 0.0
    %262 = vmatprep.subr.mxu0 0.0
    %263 = vmatpush1.msra.mxu0 0.0
    %264 = vmatprep.subr.mxu0 0.0
    %265 = vmatpush1.msra.mxu0 0.0
    %266 = vmatprep.subr.mxu0 0.0
    %267 = vmatpush1.msra.mxu0 0.0
    %268 = vmatprep.subr.mxu0 0.0
    %269 = vmatpush1.msra.mxu0 0.0
    %270 = vmatprep.subr.mxu0 0.0
    %271 = vmatpush1.msra.mxu0 0.0
    %272 = vmatprep.subr.mxu0 0.0
    %273 = vmatpush1.msra.mxu0 0.0
    %274 = vmatprep.subr.mxu0 0.0
    %275 = vmatpush1.msra.mxu0 0.0
    %276 = vmatprep.mubr.f32.mxu0 0.0
    %277 = vmatmul.mubr.f32.gmra.mrb[0].mxu0 %v210
    %v278 = vpop.f32.mrb[0].mxu0
    %v279 = vadd.f32 %v201, %v278
    %v280 = vpop.f32.mrb[0].mxu0
    %281 = vdwg.mxu0
    %v282 = vlaneseq
    %v283 = vshrl.u32 %v282, 7
    %v284 = vsub.s32 0, %v283
    %v285 = vrot.slane %v183, %v284
    %v288 = vunpack.c.l.s4 1966171168
    %v289 = vunpack.c.0.s8 %v288
    %v290 = vlaneseq
    %v291 = vshrl.u32 %v290, 7
    %v292 = vsub.s32 %v289, %v291
    %v293 = vrot.slane %v279, %v292
    %v294 = vcombine.high %v293, %v293
    %v296 = vunpack.c.l.s4 1966171168
    %v297 = vunpack.c.0.s8 %v296
    %v298 = vlaneseq
    %v299 = vshrl.u32 %v298, 7
    %v300 = vsub.s32 %v297, %v299
    %v301 = vrot.slane %v293, %v300
    %v303 = vunpack.c.l.s4 1966171168
    %v304 = vunpack.c.0.s8 %v303
    %v305 = vlaneseq
    %v306 = vshrl.u32 %v305, 7
    %v307 = vsub.s32 %v304, %v306
    %v308 = vrot.slane %v294, %v307
    %v309 = vlaneseq
    %v310 = vshrl.u32 %v309, 7
    %v311 = vsub.s32 0, %v310
    %v312 = vrot.slane %v301, %v311
    %v313 = vlaneseq
    %v314 = vshrl.u32 %v313, 7
    %v315 = vsub.s32 0, %v314
    %v316 = vrot.slane %v308, %v315
    %v319 = vadd.f32 %v312, %v175
    %v320 = vadd.f32 %v316, %v180
    %v321 = vtanh.pop %v319
    %v322 = vtanh.pop %v320
    %v323 = vlaneseq
    %v324 = vshrl.u32 %v323, 7
    %v325 = vsub.s32 1, %v324
    %v326 = vrot.slane %v88, %v325
    %v327 = vmul.f32 %v321, %v326
    %v328 = vmul.f32 %v322, %v326
    %v329 = vsel %vm208, %v327, 0.0
    %330 = vadd.xlane.f32.xlu0 %v329
    %v331 = vpop.xlane.xlu0 %330
    %v332 = vsel %vm208, %v328, 0.0
    %333 = vadd.xlane.f32.xlu0 %v332
    %v334 = vpop.xlane.xlu0 %333
    %v337 = vlaneseq
    %v338 = vshrl.u32 %v337, 7
    %v339 = vsub.s32 %v195, %v338
    %v340 = vrot.slane %v331, %v339
    %v341 = vlaneseq
    %v342 = vshrl.u32 %v341, 7
    %v343 = vsub.s32 %v195, %v342
    %v344 = vrot.slane %v334, %v343
    %vm345 = vcmask 1041409
    %v346 = vsel %vm345, %v344, %v340
    %vm348 = vcmask 58368
    %v349 = vsel %vm348, %v346, -inf
    %350 = vmax.xlane.f32.xlu0 %v349
    %v351 = vpop.xlane.xlu0 %350
    %v353 = vlaneseq
    %v354 = vshrl.u32 %v353, 7
    %v355 = vsub.s32 0, %v354
    %v356 = vrot.slane %v351, %v355
    %v357 = vlaneseq
    %v358 = vshrl.u32 %v357, 7
    %v359 = vsub.s32 1, %v358
    %v360 = vrot.slane %v351, %v359
    %v363 = vsub.f32 %v331, %v356
    %v364 = vsub.f32 %v334, %v360
    %v365 = vmul.f32 %v363, 1.442695
    %v366 = vpow.pop %v365
    %v367 = vmul.f32 %v364, 1.442695
    %v368 = vpow.pop %v367
    %371 = vset.pattern.permute.xlu0 0
    %372 = vperm.xlu0 %371, %v366
    %v373 = vpop.permute.xlu0 %372
    %374 = vset.pattern.permute.xlu0 0
    %375 = vperm.xlu0 %374, %v368
    %v376 = vpop.permute.xlu0 %375
    %v377 = vlaneseq
    %v378 = vshrl.u32 %v377, 7
    %v379 = vsub.s32 %v195, %v378
    %v380 = vrot.slane %v373, %v379
    %v381 = vlaneseq
    %v382 = vshrl.u32 %v381, 7
    %v383 = vsub.s32 %v195, %v382
    %v384 = vrot.slane %v376, %v383
    %v385 = vsel %vm345, %v384, %v380
    %v387 = vsel %vm348, %v385, 0.0
    %388 = vadd.xlane.f32.xlu0 %v387
    %v389 = vpop.xlane.xlu0 %388
    %v390 = vrcp.pop %v389
    %v392 = vlaneseq
    %v393 = vshrl.u32 %v392, 7
    %v394 = vsub.s32 0, %v393
    %v395 = vrot.slane %v390, %v394
    %v396 = vlaneseq
    %v397 = vshrl.u32 %v396, 7
    %v398 = vsub.s32 1, %v397
    %v399 = vrot.slane %v390, %v398
    %v402 = vmul.f32 %v366, %v395
    %v403 = vmul.f32 %v368, %v399
    %405 = vset.pattern.permute.xlu0 0
    %406 = vperm.xlu0 %405, %v402
    %v407 = vpop.permute.xlu0 %406
    %410 = vset.pattern.permute.xlu0 0
    %411 = vperm.xlu0 %410, %v403
    %v412 = vpop.permute.xlu0 %411
    %v414 = vmul.f32 %v407, %v175
    %v415 = vmul.f32 %v412, %v180
    %vm416 = vcmask 1047808
    %v417 = vsel %vm416, %v414, 0.0
    %v418 = vrot.slane %v417, 4
    %v419 = vadd.f32 %v417, %v418
    %v420 = vrot.slane %v419, 2
    %v421 = vadd.f32 %v419, %v420
    %v422 = vrot.slane %v421, 1
    %v423 = vadd.f32 %v421, %v422
    %v424 = vsel %vm416, %v415, 0.0
    %v425 = vrot.slane %v424, 4
    %v426 = vadd.f32 %v424, %v425
    %v427 = vrot.slane %v426, 2
    %v428 = vadd.f32 %v426, %v427
    %v429 = vrot.slane %v428, 1
    %v430 = vadd.f32 %v428, %v429
    %v433 = vsel %vm345, %v430, %v423
    %434 = vrot.lane.b32.xlu0 %v433, 96
    %v435 = vpop.permute.xlu0 %434
    %v437 = vadd.f32 %v285, %v435
    %438 = vrot.lane.b32.xlu0 %v279, 96
    %v439 = vpop.permute.xlu0 %438
    %v441 = vadd.f32 %v437, %v439
    %v442 = vxor.u32 %v441, 2147483648
    %v443 = vmul.f32 %v442, 1.442695
    %v444 = vpow.pop %v443
    %v445 = vadd.f32 %v444, 1.0
    %v446 = vrcp.pop %v445
    %v447 = vmul.f32 1.0, %v446
    %448 = vrot.lane.b32.xlu0 %v279, 32
    %v449 = vpop.permute.xlu0 %448
    %v451 = vmul.f32 %v447, %v449
    %453 = vrot.lane.b32.xlu0 %v451, 64
    %v454 = vpop.permute.xlu0 %453
    %v456 = vadd.f32 %v437, %v454
    %v457 = vtanh.pop %v456
    %v458 = vsub.f32 1.0, %v447
    %460 = vrot.lane.b32.xlu0 %v457, 96
    %v461 = vpop.permute.xlu0 %460
    %v463 = vmul.f32 %v458, %v461
    %464 = vrot.lane.b32.xlu0 %v196, 32
    %v465 = vpop.permute.xlu0 %464
    %v467 = vmul.f32 %v447, %v465
    %v468 = vadd.f32 %v463, %v467
    %470 = vrot.lane.b32.xlu0 %v468, 96
    %v471 = vpop.permute.xlu0 %470
    %v472 = vsel %vm208, %v471, 0
    %474 = vmatprep.subr.mxu0 %v186
    %475 = vmatpush1.msra.mxu0 %v185
    %476 = vmatprep.subr.mxu0 %v188
    %477 = vmatpush1.msra.mxu0 %v187
    %478 = vmatprep.subr.mxu0 %v190
    %479 = vmatpush1.msra.mxu0 %v189
    %480 = vmatprep.subr.mxu0 %v192
    %481 = vmatpush1.msra.mxu0 %v191
    %482 = vmatprep.subr.mxu0 0.0
    %483 = vmatpush1.msra.mxu0 0.0
    %484 = vmatprep.subr.mxu0 0.0
    %485 = vmatpush1.msra.mxu0 0.0
    %486 = vmatprep.subr.mxu0 0.0
    %487 = vmatpush1.msra.mxu0 0.0
    %488 = vmatprep.subr.mxu0 0.0
    %489 = vmatpush1.msra.mxu0 0.0
    %490 = vmatprep.subr.mxu0 0.0
    %491 = vmatpush1.msra.mxu0 0.0
    %492 = vmatprep.subr.mxu0 0.0
    %493 = vmatpush1.msra.mxu0 0.0
    %494 = vmatprep.subr.mxu0 0.0
    %495 = vmatpush1.msra.mxu0 0.0
    %496 = vmatprep.subr.mxu0 0.0
    %497 = vmatpush1.msra.mxu0 0.0
    %498 = vmatprep.subr.mxu0 0.0
    %499 = vmatpush1.msra.mxu0 0.0
    %500 = vmatprep.subr.mxu0 0.0
    %501 = vmatpush1.msra.mxu0 0.0
    %502 = vmatprep.subr.mxu0 0.0
    %503 = vmatpush1.msra.mxu0 0.0
    %504 = vmatprep.subr.mxu0 0.0
    %505 = vmatpush1.msra.mxu0 0.0
    %506 = vmatprep.subr.mxu0 0.0
    %507 = vmatpush1.msra.mxu0 0.0
    %508 = vmatprep.subr.mxu0 0.0
    %509 = vmatpush1.msra.mxu0 0.0
    %510 = vmatprep.subr.mxu0 0.0
    %511 = vmatpush1.msra.mxu0 0.0
    %512 = vmatprep.subr.mxu0 0.0
    %513 = vmatpush1.msra.mxu0 0.0
    %514 = vmatprep.subr.mxu0 0.0
    %515 = vmatpush1.msra.mxu0 0.0
    %516 = vmatprep.subr.mxu0 0.0
    %517 = vmatpush1.msra.mxu0 0.0
    %518 = vmatprep.subr.mxu0 0.0
    %519 = vmatpush1.msra.mxu0 0.0
    %520 = vmatprep.subr.mxu0 0.0
    %521 = vmatpush1.msra.mxu0 0.0
    %522 = vmatprep.subr.mxu0 0.0
    %523 = vmatpush1.msra.mxu0 0.0
    %524 = vmatprep.subr.mxu0 0.0
    %525 = vmatpush1.msra.mxu0 0.0
    %526 = vmatprep.subr.mxu0 0.0
    %527 = vmatpush1.msra.mxu0 0.0
    %528 = vmatprep.subr.mxu0 0.0
    %529 = vmatpush1.msra.mxu0 0.0
    %530 = vmatprep.subr.mxu0 0.0
    %531 = vmatpush1.msra.mxu0 0.0
    %532 = vmatprep.subr.mxu0 0.0
    %533 = vmatpush1.msra.mxu0 0.0
    %534 = vmatprep.subr.mxu0 0.0
    %535 = vmatpush1.msra.mxu0 0.0
    %536 = vmatprep.subr.mxu0 0.0
    %537 = vmatpush1.msra.mxu0 0.0
    %538 = vmatprep.mubr.f32.mxu0 0.0
    %539 = vmatmul.mubr.f32.gmra.mrb[0].mxu0 %v472
    %v540 = vpop.f32.mrb[0].mxu0
    %v541 = vadd.f32 %v201, %v540
    %v542 = vpop.f32.mrb[0].mxu0
    %v543 = vadd.f32 %v205, %v542
    %544 = vdwg.mxu0
    %vm545 = vcmask 123904
    %546 = vst.msk [vmem:[#allocation10] sm:$0x3] %vm545, %v543
    %v547 = vlaneseq
    %v548 = vshrl.u32 %v547, 7
    %v549 = vsub.s32 %v195, %v548
    %v550 = vrot.slane %v407, %v549
    %v551 = vlaneseq
    %v552 = vshrl.u32 %v551, 7
    %v553 = vsub.s32 %v195, %v552
    %v554 = vrot.slane %v412, %v553
    %v555 = vsel %vm345, %v554, %v550
    %557 = vst.msk [vmem:[%s9] sm:$0x3] %vm348, %v555
    %v558 = vsel %vm545, %v543, -inf
    %559 = vmax.xlane.f32.xlu0 %v558
    %v560 = vpop.xlane.xlu0 %559
    %vm561 = vcmp.ge.f32.partialorder %v543, %v560
    %v562 = vsel %vm561, %v195, 16
    %v563 = vsel %vm545, %v562, 2147483647
    %v564 = vand.u32 %v563, 65535
    %v565 = vshra.s32 %v563, 16
    %v566 = vcvt.s32.f32 %v564
    %v567 = vcvt.s32.f32 %v565
    %568 = vmin.xlane.f32.xlu0 %v567
    %v569 = vpop.xlane.xlu0 %568
    %vm570 = vcmp.eq.f32.partialorder %v567, %v569
    %v571 = vsel %vm570, %v566, inf
    %572 = vmin.xlane.f32.xlu0 %v571
    %v573 = vpop.xlane.xlu0 %572
    %v574 = vcvt.f32.s32 %v573
    %v575 = vcvt.f32.s32 %v569
    %v576 = vshll.u32 %v575, 16
    %v577 = vadd.s32 %v576, %v574
    %vm578 = vcmp.eq.s32.totalorder %v577, %v195
    %v579 = vsel %vm578, 1, 0
    %v580 = vcvt.s32.f32 %v579
    %v583 = vunpack.c.l.s4 1966171168
    %v584 = vunpack.c.0.s8 %v583
    %v585 = vlaneseq
    %v586 = vshrl.u32 %v585, 7
    %v587 = vsub.s32 %v584, %v586
    %v588 = vrot.slane %v541, %v587
    %v589 = vcombine.high %v588, %v588
    %v591 = vunpack.c.l.s4 1966171168
    %v592 = vunpack.c.0.s8 %v591
    %v593 = vlaneseq
    %v594 = vshrl.u32 %v593, 7
    %v595 = vsub.s32 %v592, %v594
    %v596 = vrot.slane %v588, %v595
    %v598 = vunpack.c.l.s4 1966171168
    %v599 = vunpack.c.0.s8 %v598
    %v600 = vlaneseq
    %v601 = vshrl.u32 %v600, 7
    %v602 = vsub.s32 %v599, %v601
    %v603 = vrot.slane %v589, %v602
    %v604 = vlaneseq
    %v605 = vshrl.u32 %v604, 7
    %v606 = vsub.s32 0, %v605
    %v607 = vrot.slane %v596, %v606
    %v608 = vlaneseq
    %v609 = vshrl.u32 %v608, 7
    %v610 = vsub.s32 0, %v609
    %v611 = vrot.slane %v603, %v610
    %v614 = vadd.f32 %v607, %v175
    %v615 = vadd.f32 %v611, %v180
    %v616 = vtanh.pop %v614
    %v617 = vtanh.pop %v615
    %v618 = vmul.f32 %v616, %v326
    %v619 = vmul.f32 %v617, %v326
    %v620 = vsel %vm208, %v618, 0.0
    %621 = vadd.xlane.f32.xlu0 %v620
    %v622 = vpop.xlane.xlu0 %621
    %v623 = vsel %vm208, %v619, 0.0
    %624 = vadd.xlane.f32.xlu0 %v623
    %v625 = vpop.xlane.xlu0 %624
    %v628 = vlaneseq
    %v629 = vshrl.u32 %v628, 7
    %v630 = vsub.s32 %v195, %v629
    %v631 = vrot.slane %v622, %v630
    %v632 = vlaneseq
    %v633 = vshrl.u32 %v632, 7
    %v634 = vsub.s32 %v195, %v633
    %v635 = vrot.slane %v625, %v634
    %v636 = vsel %vm345, %v635, %v631
    %v638 = vsel %vm348, %v636, -inf
    %639 = vmax.xlane.f32.xlu0 %v638
    %v640 = vpop.xlane.xlu0 %639
    %v642 = vlaneseq
    %v643 = vshrl.u32 %v642, 7
    %v644 = vsub.s32 0, %v643
    %v645 = vrot.slane %v640, %v644
    %v646 = vlaneseq
    %v647 = vshrl.u32 %v646, 7
    %v648 = vsub.s32 1, %v647
    %v649 = vrot.slane %v640, %v648
    %v652 = vsub.f32 %v622, %v645
    %v653 = vsub.f32 %v625, %v649
    %v654 = vmul.f32 %v652, 1.442695
    %v655 = vpow.pop %v654
    %v656 = vmul.f32 %v653, 1.442695
    %v657 = vpow.pop %v656
    %660 = vset.pattern.permute.xlu0 0
    %661 = vperm.xlu0 %660, %v655
    %v662 = vpop.permute.xlu0 %661
    %663 = vset.pattern.permute.xlu0 0
    %664 = vperm.xlu0 %663, %v657
    %v665 = vpop.permute.xlu0 %664
    %v666 = vlaneseq
    %v667 = vshrl.u32 %v666, 7
    %v668 = vsub.s32 %v195, %v667
    %v669 = vrot.slane %v662, %v668
    %v670 = vlaneseq
    %v671 = vshrl.u32 %v670, 7
    %v672 = vsub.s32 %v195, %v671
    %v673 = vrot.slane %v665, %v672
    %v674 = vsel %vm345, %v673, %v669
    %v676 = vsel %vm348, %v674, 0.0
    %677 = vadd.xlane.f32.xlu0 %v676
    %v678 = vpop.xlane.xlu0 %677
    %v679 = vrcp.pop %v678
    %v681 = vlaneseq
    %v682 = vshrl.u32 %v681, 7
    %v683 = vsub.s32 0, %v682
    %v684 = vrot.slane %v679, %v683
    %v685 = vlaneseq
    %v686 = vshrl.u32 %v685, 7
    %v687 = vsub.s32 1, %v686
    %v688 = vrot.slane %v679, %v687
    %v691 = vmul.f32 %v655, %v684
    %v692 = vmul.f32 %v657, %v688
    %694 = vset.pattern.permute.xlu0 0
    %695 = vperm.xlu0 %694, %v691
    %v696 = vpop.permute.xlu0 %695
    %699 = vset.pattern.permute.xlu0 0
    %700 = vperm.xlu0 %699, %v692
    %v701 = vpop.permute.xlu0 %700
    %v703 = vmul.f32 %v696, %v175
    %v704 = vmul.f32 %v701, %v180
    %v705 = vsel %vm416, %v703, 0.0
    %v706 = vrot.slane %v705, 4
    %v707 = vadd.f32 %v705, %v706
    %v708 = vrot.slane %v707, 2
    %v709 = vadd.f32 %v707, %v708
    %v710 = vrot.slane %v709, 1
    %v711 = vadd.f32 %v709, %v710
    %v712 = vsel %vm416, %v704, 0.0
    %v713 = vrot.slane %v712, 4
    %v714 = vadd.f32 %v712, %v713
    %v715 = vrot.slane %v714, 2
    %v716 = vadd.f32 %v714, %v715
    %v717 = vrot.slane %v716, 1
    %v718 = vadd.f32 %v716, %v717
    %v721 = vsel %vm345, %v718, %v711
    %722 = vrot.lane.b32.xlu0 %v721, 96
    %v723 = vpop.permute.xlu0 %722
    %vm725 = vcmask 130048
    %v727 = vsel %vm725, %v580, 0
    %729 = vmatprep.subr.mxu0 0.0
    %730 = vmatpush1.msra.mxu0 %v183
    %731 = vmatprep.subr.mxu0 0.0
    %732 = vmatpush1.msra.mxu0 %v184
    %733 = vmatprep.subr.mxu0 0.0
    %734 = vmatpush1.msra.mxu0 0.0
    %735 = vmatprep.subr.mxu0 0.0
    %736 = vmatpush1.msra.mxu0 0.0
    %737 = vmatprep.subr.mxu0 0.0
    %738 = vmatpush1.msra.mxu0 0.0
    %739 = vmatprep.subr.mxu0 0.0
    %740 = vmatpush1.msra.mxu0 0.0
    %741 = vmatprep.subr.mxu0 0.0
    %742 = vmatpush1.msra.mxu0 0.0
    %743 = vmatprep.subr.mxu0 0.0
    %744 = vmatpush1.msra.mxu0 0.0
    %745 = vmatprep.subr.mxu0 0.0
    %746 = vmatpush1.msra.mxu0 0.0
    %747 = vmatprep.subr.mxu0 0.0
    %748 = vmatpush1.msra.mxu0 0.0
    %749 = vmatprep.subr.mxu0 0.0
    %750 = vmatpush1.msra.mxu0 0.0
    %751 = vmatprep.subr.mxu0 0.0
    %752 = vmatpush1.msra.mxu0 0.0
    %753 = vmatprep.subr.mxu0 0.0
    %754 = vmatpush1.msra.mxu0 0.0
    %755 = vmatprep.subr.mxu0 0.0
    %756 = vmatpush1.msra.mxu0 0.0
    %757 = vmatprep.subr.mxu0 0.0
    %758 = vmatpush1.msra.mxu0 0.0
    %759 = vmatprep.subr.mxu0 0.0
    %760 = vmatpush1.msra.mxu0 0.0
    %761 = vmatprep.subr.mxu0 0.0
    %762 = vmatpush1.msra.mxu0 0.0
    %763 = vmatprep.subr.mxu0 0.0
    %764 = vmatpush1.msra.mxu0 0.0
    %765 = vmatprep.subr.mxu0 0.0
    %766 = vmatpush1.msra.mxu0 0.0
    %767 = vmatprep.subr.mxu0 0.0
    %768 = vmatpush1.msra.mxu0 0.0
    %769 = vmatprep.subr.mxu0 0.0
    %770 = vmatpush1.msra.mxu0 0.0
    %771 = vmatprep.subr.mxu0 0.0
    %772 = vmatpush1.msra.mxu0 0.0
    %773 = vmatprep.subr.mxu0 0.0
    %774 = vmatpush1.msra.mxu0 0.0
    %775 = vmatprep.subr.mxu0 0.0
    %776 = vmatpush1.msra.mxu0 0.0
    %777 = vmatprep.subr.mxu0 0.0
    %778 = vmatpush1.msra.mxu0 0.0
    %779 = vmatprep.subr.mxu0 0.0
    %780 = vmatpush1.msra.mxu0 0.0
    %781 = vmatprep.subr.mxu0 0.0
    %782 = vmatpush1.msra.mxu0 0.0
    %783 = vmatprep.subr.mxu0 0.0
    %784 = vmatpush1.msra.mxu0 0.0
    %785 = vmatprep.subr.mxu0 0.0
    %786 = vmatpush1.msra.mxu0 0.0
    %787 = vmatprep.subr.mxu0 0.0
    %788 = vmatpush1.msra.mxu0 0.0
    %789 = vmatprep.subr.mxu0 0.0
    %790 = vmatpush1.msra.mxu0 0.0
    %791 = vmatprep.subr.mxu0 0.0
    %792 = vmatpush1.msra.mxu0 0.0
    %793 = vmatprep.mubr.f32.mxu0 0.0
    %794 = vmatmul.mubr.f32.gmra.mrb[0].mxu0 %v727
    %v795 = vpop.f32.mrb[0].mxu0
    %v796 = vadd.f32 %v723, %v795
    %v797 = vpop.f32.mrb[0].mxu0
    %798 = vdwg.mxu0
    %799 = vrot.lane.b32.xlu0 %v541, 96
    %v800 = vpop.permute.xlu0 %799
    %v802 = vadd.f32 %v796, %v800
    %v803 = vxor.u32 %v802, 2147483648
    %v804 = vmul.f32 %v803, 1.442695
    %v805 = vpow.pop %v804
    %v806 = vadd.f32 %v805, 1.0
    %v807 = vrcp.pop %v806
    %v808 = vmul.f32 1.0, %v807
    %809 = vrot.lane.b32.xlu0 %v541, 32
    %v810 = vpop.permute.xlu0 %809
    %v812 = vmul.f32 %v808, %v810
    %814 = vrot.lane.b32.xlu0 %v812, 64
    %v815 = vpop.permute.xlu0 %814
    %v817 = vadd.f32 %v796, %v815
    %v818 = vtanh.pop %v817
    %v819 = vsub.f32 1.0, %v808
    %821 = vrot.lane.b32.xlu0 %v818, 96
    %v822 = vpop.permute.xlu0 %821
    %v824 = vmul.f32 %v819, %v822
    %v825 = vmul.f32 %v808, %v468
    %v826 = vadd.f32 %v824, %v825
    %828 = vrot.lane.b32.xlu0 %v826, 96
    %v829 = vpop.permute.xlu0 %828
    %v830 = vsel %vm208, %v829, 0
    %832 = vmatprep.subr.mxu0 %v186
    %833 = vmatpush1.msra.mxu0 %v185
    %834 = vmatprep.subr.mxu0 %v188
    %835 = vmatpush1.msra.mxu0 %v187
    %836 = vmatprep.subr.mxu0 %v190
    %837 = vmatpush1.msra.mxu0 %v189
    %838 = vmatprep.subr.mxu0 %v192
    %839 = vmatpush1.msra.mxu0 %v191
    %840 = vmatprep.subr.mxu0 0.0
    %841 = vmatpush1.msra.mxu0 0.0
    %842 = vmatprep.subr.mxu0 0.0
    %843 = vmatpush1.msra.mxu0 0.0
    %844 = vmatprep.subr.mxu0 0.0
    %845 = vmatpush1.msra.mxu0 0.0
    %846 = vmatprep.subr.mxu0 0.0
    %847 = vmatpush1.msra.mxu0 0.0
    %848 = vmatprep.subr.mxu0 0.0
    %849 = vmatpush1.msra.mxu0 0.0
    %850 = vmatprep.subr.mxu0 0.0
    %851 = vmatpush1.msra.mxu0 0.0
    %852 = vmatprep.subr.mxu0 0.0
    %853 = vmatpush1.msra.mxu0 0.0
    %854 = vmatprep.subr.mxu0 0.0
    %855 = vmatpush1.msra.mxu0 0.0
    %856 = vmatprep.subr.mxu0 0.0
    %857 = vmatpush1.msra.mxu0 0.0
    %858 = vmatprep.subr.mxu0 0.0
    %859 = vmatpush1.msra.mxu0 0.0
    %860 = vmatprep.subr.mxu0 0.0
    %861 = vmatpush1.msra.mxu0 0.0
    %862 = vmatprep.subr.mxu0 0.0
    %863 = vmatpush1.msra.mxu0 0.0
    %864 = vmatprep.subr.mxu0 0.0
    %865 = vmatpush1.msra.mxu0 0.0
    %866 = vmatprep.subr.mxu0 0.0
    %867 = vmatpush1.msra.mxu0 0.0
    %868 = vmatprep.subr.mxu0 0.0
    %869 = vmatpush1.msra.mxu0 0.0
    %870 = vmatprep.subr.mxu0 0.0
    %871 = vmatpush1.msra.mxu0 0.0
    %872 = vmatprep.subr.mxu0 0.0
    %873 = vmatpush1.msra.mxu0 0.0
    %874 = vmatprep.subr.mxu0 0.0
    %875 = vmatpush1.msra.mxu0 0.0
    %876 = vmatprep.subr.mxu0 0.0
    %877 = vmatpush1.msra.mxu0 0.0
    %878 = vmatprep.subr.mxu0 0.0
    %879 = vmatpush1.msra.mxu0 0.0
    %880 = vmatprep.subr.mxu0 0.0
    %881 = vmatpush1.msra.mxu0 0.0
    %882 = vmatprep.subr.mxu0 0.0
    %883 = vmatpush1.msra.mxu0 0.0
    %884 = vmatprep.subr.mxu0 0.0
    %885 = vmatpush1.msra.mxu0 0.0
    %886 = vmatprep.subr.mxu0 0.0
    %887 = vmatpush1.msra.mxu0 0.0
    %888 = vmatprep.subr.mxu0 0.0
    %889 = vmatpush1.msra.mxu0 0.0
    %890 = vmatprep.subr.mxu0 0.0
    %891 = vmatpush1.msra.mxu0 0.0
    %892 = vmatprep.subr.mxu0 0.0
    %893 = vmatpush1.msra.mxu0 0.0
    %894 = vmatprep.subr.mxu0 0.0
    %895 = vmatpush1.msra.mxu0 0.0
    %896 = vmatprep.mubr.f32.mxu0 0.0
    %897 = vmatmul.mubr.f32.gmra.mrb[0].mxu0 %v830
    %v898 = vpop.f32.mrb[0].mxu0
    %v899 = vadd.f32 %v201, %v898
    %v900 = vpop.f32.mrb[0].mxu0
    %v901 = vadd.f32 %v205, %v900
    %902 = vdwg.mxu0
    %903 = vst.msk [vmem:[#allocation10 + $0x2] sm:$0x3] %vm545, %v901
    %v904 = vlaneseq
    %v905 = vshrl.u32 %v904, 7
    %v906 = vsub.s32 %v195, %v905
    %v907 = vrot.slane %v696, %v906
    %v908 = vlaneseq
    %v909 = vshrl.u32 %v908, 7
    %v910 = vsub.s32 %v195, %v909
    %v911 = vrot.slane %v701, %v910
    %v912 = vsel %vm345, %v911, %v907
    %914 = vst.msk [vmem:[%s9 + $0x2] sm:$0x3] %vm348, %v912
    %v915 = vsel %vm545, %v901, -inf
    %916 = vmax.xlane.f32.xlu0 %v915
    %v917 = vpop.xlane.xlu0 %916
    %vm918 = vcmp.ge.f32.partialorder %v901, %v917
    %v919 = vsel %vm918, %v195, 16
    %v920 = vsel %vm545, %v919, 2147483647
    %v921 = vand.u32 %v920, 65535
    %v922 = vshra.s32 %v920, 16
    %v923 = vcvt.s32.f32 %v921
    %v924 = vcvt.s32.f32 %v922
    %925 = vmin.xlane.f32.xlu0 %v924
    %v926 = vpop.xlane.xlu0 %925
    %vm927 = vcmp.eq.f32.partialorder %v924, %v926
    %v928 = vsel %vm927, %v923, inf
    %929 = vmin.xlane.f32.xlu0 %v928
    %v930 = vpop.xlane.xlu0 %929
    %v931 = vcvt.f32.s32 %v930
    %v932 = vcvt.f32.s32 %v926
    %v933 = vshll.u32 %v932, 16
    %v934 = vadd.s32 %v933, %v931
    %vm935 = vcmp.eq.s32.totalorder %v934, %v195
    %v936 = vsel %vm935, 1, 0
    %v937 = vcvt.s32.f32 %v936
    %v940 = vunpack.c.l.s4 1966171168
    %v941 = vunpack.c.0.s8 %v940
    %v942 = vlaneseq
    %v943 = vshrl.u32 %v942, 7
    %v944 = vsub.s32 %v941, %v943
    %v945 = vrot.slane %v899, %v944
    %v946 = vcombine.high %v945, %v945
    %v948 = vunpack.c.l.s4 1966171168
    %v949 = vunpack.c.0.s8 %v948
    %v950 = vlaneseq
    %v951 = vshrl.u32 %v950, 7
    %v952 = vsub.s32 %v949, %v951
    %v953 = vrot.slane %v945, %v952
    %v955 = vunpack.c.l.s4 1966171168
    %v956 = vunpack.c.0.s8 %v955
    %v957 = vlaneseq
    %v958 = vshrl.u32 %v957, 7
    %v959 = vsub.s32 %v956, %v958
    %v960 = vrot.slane %v946, %v959
    %v961 = vlaneseq
    %v962 = vshrl.u32 %v961, 7
    %v963 = vsub.s32 0, %v962
    %v964 = vrot.slane %v953, %v963
    %v965 = vlaneseq
    %v966 = vshrl.u32 %v965, 7
    %v967 = vsub.s32 0, %v966
    %v968 = vrot.slane %v960, %v967
    %v971 = vadd.f32 %v964, %v175
    %v972 = vadd.f32 %v968, %v180
    %v973 = vtanh.pop %v971
    %v974 = vtanh.pop %v972
    %v975 = vmul.f32 %v973, %v326
    %v976 = vmul.f32 %v974, %v326
    %v977 = vsel %vm208, %v975, 0.0
    %978 = vadd.xlane.f32.xlu0 %v977
    %v979 = vpop.xlane.xlu0 %978
    %v980 = vsel %vm208, %v976, 0.0
    %981 = vadd.xlane.f32.xlu0 %v980
    %v982 = vpop.xlane.xlu0 %981
    %v985 = vlaneseq
    %v986 = vshrl.u32 %v985, 7
    %v987 = vsub.s32 %v195, %v986
    %v988 = vrot.slane %v979, %v987
    %v989 = vlaneseq
    %v990 = vshrl.u32 %v989, 7
    %v991 = vsub.s32 %v195, %v990
    %v992 = vrot.slane %v982, %v991
    %v993 = vsel %vm345, %v992, %v988
    %v995 = vsel %vm348, %v993, -inf
    %996 = vmax.xlane.f32.xlu0 %v995
    %v997 = vpop.xlane.xlu0 %996
    %v999 = vlaneseq
    %v1000 = vshrl.u32 %v999, 7
    %v1001 = vsub.s32 0, %v1000
    %v1002 = vrot.slane %v997, %v1001
    %v1003 = vlaneseq
    %v1004 = vshrl.u32 %v1003, 7
    %v1005 = vsub.s32 1, %v1004
    %v1006 = vrot.slane %v997, %v1005
    %v1009 = vsub.f32 %v979, %v1002
    %v1010 = vsub.f32 %v982, %v1006
    %v1011 = vmul.f32 %v1009, 1.442695
    %v1012 = vpow.pop %v1011
    %v1013 = vmul.f32 %v1010, 1.442695
    %v1014 = vpow.pop %v1013
    %1017 = vset.pattern.permute.xlu0 0
    %1018 = vperm.xlu0 %1017, %v1012
    %v1019 = vpop.permute.xlu0 %1018
    %1020 = vset.pattern.permute.xlu0 0
    %1021 = vperm.xlu0 %1020, %v1014
    %v1022 = vpop.permute.xlu0 %1021
    %v1023 = vlaneseq
    %v1024 = vshrl.u32 %v1023, 7
    %v1025 = vsub.s32 %v195, %v1024
    %v1026 = vrot.slane %v1019, %v1025
    %v1027 = vlaneseq
    %v1028 = vshrl.u32 %v1027, 7
    %v1029 = vsub.s32 %v195, %v1028
    %v1030 = vrot.slane %v1022, %v1029
    %v1031 = vsel %vm345, %v1030, %v1026
    %v1033 = vsel %vm348, %v1031, 0.0
    %1034 = vadd.xlane.f32.xlu0 %v1033
    %v1035 = vpop.xlane.xlu0 %1034
    %v1036 = vrcp.pop %v1035
    %v1038 = vlaneseq
    %v1039 = vshrl.u32 %v1038, 7
    %v1040 = vsub.s32 0, %v1039
    %v1041 = vrot.slane %v1036, %v1040
    %v1042 = vlaneseq
    %v1043 = vshrl.u32 %v1042, 7
    %v1044 = vsub.s32 1, %v1043
    %v1045 = vrot.slane %v1036, %v1044
    %v1048 = vmul.f32 %v1012, %v1041
    %v1049 = vmul.f32 %v1014, %v1045
    %1051 = vset.pattern.permute.xlu0 0
    %1052 = vperm.xlu0 %1051, %v1048
    %v1053 = vpop.permute.xlu0 %1052
    %1056 = vset.pattern.permute.xlu0 0
    %1057 = vperm.xlu0 %1056, %v1049
    %v1058 = vpop.permute.xlu0 %1057
    %v1060 = vmul.f32 %v1053, %v175
    %v1061 = vmul.f32 %v1058, %v180
    %v1062 = vsel %vm416, %v1060, 0.0
    %v1063 = vrot.slane %v1062, 4
    %v1064 = vadd.f32 %v1062, %v1063
    %v1065 = vrot.slane %v1064, 2
    %v1066 = vadd.f32 %v1064, %v1065
    %v1067 = vrot.slane %v1066, 1
    %v1068 = vadd.f32 %v1066, %v1067
    %v1069 = vsel %vm416, %v1061, 0.0
    %v1070 = vrot.slane %v1069, 4
    %v1071 = vadd.f32 %v1069, %v1070
    %v1072 = vrot.slane %v1071, 2
    %v1073 = vadd.f32 %v1071, %v1072
    %v1074 = vrot.slane %v1073, 1
    %v1075 = vadd.f32 %v1073, %v1074
    %v1078 = vsel %vm345, %v1075, %v1068
    %1079 = vrot.lane.b32.xlu0 %v1078, 96
    %v1080 = vpop.permute.xlu0 %1079
    %v1083 = vsel %vm725, %v937, 0
    %1085 = vmatprep.subr.mxu0 0.0
    %1086 = vmatpush1.msra.mxu0 %v183
    %1087 = vmatprep.subr.mxu0 0.0
    %1088 = vmatpush1.msra.mxu0 %v184
    %1089 = vmatprep.subr.mxu0 0.0
    %1090 = vmatpush1.msra.mxu0 0.0
    %1091 = vmatprep.subr.mxu0 0.0
    %1092 = vmatpush1.msra.mxu0 0.0
    %1093 = vmatprep.subr.mxu0 0.0
    %1094 = vmatpush1.msra.mxu0 0.0
    %1095 = vmatprep.subr.mxu0 0.0
    %1096 = vmatpush1.msra.mxu0 0.0
    %1097 = vmatprep.subr.mxu0 0.0
    %1098 = vmatpush1.msra.mxu0 0.0
    %1099 = vmatprep.subr.mxu0 0.0
    %1100 = vmatpush1.msra.mxu0 0.0
    %1101 = vmatprep.subr.mxu0 0.0
    %1102 = vmatpush1.msra.mxu0 0.0
    %1103 = vmatprep.subr.mxu0 0.0
    %1104 = vmatpush1.msra.mxu0 0.0
    %1105 = vmatprep.subr.mxu0 0.0
    %1106 = vmatpush1.msra.mxu0 0.0
    %1107 = vmatprep.subr.mxu0 0.0
    %1108 = vmatpush1.msra.mxu0 0.0
    %1109 = vmatprep.subr.mxu0 0.0
    %1110 = vmatpush1.msra.mxu0 0.0
    %1111 = vmatprep.subr.mxu0 0.0
    %1112 = vmatpush1.msra.mxu0 0.0
    %1113 = vmatprep.subr.mxu0 0.0
    %1114 = vmatpush1.msra.mxu0 0.0
    %1115 = vmatprep.subr.mxu0 0.0
    %1116 = vmatpush1.msra.mxu0 0.0
    %1117 = vmatprep.subr.mxu0 0.0
    %1118 = vmatpush1.msra.mxu0 0.0
    %1119 = vmatprep.subr.mxu0 0.0
    %1120 = vmatpush1.msra.mxu0 0.0
    %1121 = vmatprep.subr.mxu0 0.0
    %1122 = vmatpush1.msra.mxu0 0.0
    %1123 = vmatprep.subr.mxu0 0.0
    %1124 = vmatpush1.msra.mxu0 0.0
    %1125 = vmatprep.subr.mxu0 0.0
    %1126 = vmatpush1.msra.mxu0 0.0
    %1127 = vmatprep.subr.mxu0 0.0
    %1128 = vmatpush1.msra.mxu0 0.0
    %1129 = vmatprep.subr.mxu0 0.0
    %1130 = vmatpush1.msra.mxu0 0.0
    %1131 = vmatprep.subr.mxu0 0.0
    %1132 = vmatpush1.msra.mxu0 0.0
    %1133 = vmatprep.subr.mxu0 0.0
    %1134 = vmatpush1.msra.mxu0 0.0
    %1135 = vmatprep.subr.mxu0 0.0
    %1136 = vmatpush1.msra.mxu0 0.0
    %1137 = vmatprep.subr.mxu0 0.0
    %1138 = vmatpush1.msra.mxu0 0.0
    %1139 = vmatprep.subr.mxu0 0.0
    %1140 = vmatpush1.msra.mxu0 0.0
    %1141 = vmatprep.subr.mxu0 0.0
    %1142 = vmatpush1.msra.mxu0 0.0
    %1143 = vmatprep.subr.mxu0 0.0
    %1144 = vmatpush1.msra.mxu0 0.0
    %1145 = vmatprep.subr.mxu0 0.0
    %1146 = vmatpush1.msra.mxu0 0.0
    %1147 = vmatprep.subr.mxu0 0.0
    %1148 = vmatpush1.msra.mxu0 0.0
    %1149 = vmatprep.mubr.f32.mxu0 0.0
    %1150 = vmatmul.mubr.f32.gmra.mrb[0].mxu0 %v1083
    %v1151 = vpop.f32.mrb[0].mxu0
    %v1152 = vadd.f32 %v1080, %v1151
    %v1153 = vpop.f32.mrb[0].mxu0
    %1154 = vdwg.mxu0
    %1155 = vrot.lane.b32.xlu0 %v899, 96
    %v1156 = vpop.permute.xlu0 %1155
    %v1158 = vadd.f32 %v1152, %v1156
    %v1159 = vxor.u32 %v1158, 2147483648
    %v1160 = vmul.f32 %v1159, 1.442695
    %v1161 = vpow.pop %v1160
    %v1162 = vadd.f32 %v1161, 1.0
    %v1163 = vrcp.pop %v1162
    %v1164 = vmul.f32 1.0, %v1163
    %1165 = vrot.lane.b32.xlu0 %v899, 32
    %v1166 = vpop.permute.xlu0 %1165
    %v1168 = vmul.f32 %v1164, %v1166
    %1170 = vrot.lane.b32.xlu0 %v1168, 64
    %v1171 = vpop.permute.xlu0 %1170
    %v1173 = vadd.f32 %v1152, %v1171
    %v1174 = vtanh.pop %v1173
    %v1175 = vsub.f32 1.0, %v1164
    %1177 = vrot.lane.b32.xlu0 %v1174, 96
    %v1178 = vpop.permute.xlu0 %1177
    %v1180 = vmul.f32 %v1175, %v1178
    %v1181 = vmul.f32 %v1164, %v826
    %v1182 = vadd.f32 %v1180, %v1181
    %1184 = vrot.lane.b32.xlu0 %v1182, 96
    %v1185 = vpop.permute.xlu0 %1184
    %v1186 = vsel %vm208, %v1185, 0
    %1188 = vmatprep.subr.mxu0 %v186
    %1189 = vmatpush1.msra.mxu0 %v185
    %1190 = vmatprep.subr.mxu0 %v188
    %1191 = vmatpush1.msra.mxu0 %v187
    %1192 = vmatprep.subr.mxu0 %v190
    %1193 = vmatpush1.msra.mxu0 %v189
    %1194 = vmatprep.subr.mxu0 %v192
    %1195 = vmatpush1.msra.mxu0 %v191
    %1196 = vmatprep.subr.mxu0 0.0
    %1197 = vmatpush1.msra.mxu0 0.0
    %1198 = vmatprep.subr.mxu0 0.0
    %1199 = vmatpush1.msra.mxu0 0.0
    %1200 = vmatprep.subr.mxu0 0.0
    %1201 = vmatpush1.msra.mxu0 0.0
    %1202 = vmatprep.subr.mxu0 0.0
    %1203 = vmatpush1.msra.mxu0 0.0
    %1204 = vmatprep.subr.mxu0 0.0
    %1205 = vmatpush1.msra.mxu0 0.0
    %1206 = vmatprep.subr.mxu0 0.0
    %1207 = vmatpush1.msra.mxu0 0.0
    %1208 = vmatprep.subr.mxu0 0.0
    %1209 = vmatpush1.msra.mxu0 0.0
    %1210 = vmatprep.subr.mxu0 0.0
    %1211 = vmatpush1.msra.mxu0 0.0
    %1212 = vmatprep.subr.mxu0 0.0
    %1213 = vmatpush1.msra.mxu0 0.0
    %1214 = vmatprep.subr.mxu0 0.0
    %1215 = vmatpush1.msra.mxu0 0.0
    %1216 = vmatprep.subr.mxu0 0.0
    %1217 = vmatpush1.msra.mxu0 0.0
    %1218 = vmatprep.subr.mxu0 0.0
    %1219 = vmatpush1.msra.mxu0 0.0
    %1220 = vmatprep.subr.mxu0 0.0
    %1221 = vmatpush1.msra.mxu0 0.0
    %1222 = vmatprep.subr.mxu0 0.0
    %1223 = vmatpush1.msra.mxu0 0.0
    %1224 = vmatprep.subr.mxu0 0.0
    %1225 = vmatpush1.msra.mxu0 0.0
    %1226 = vmatprep.subr.mxu0 0.0
    %1227 = vmatpush1.msra.mxu0 0.0
    %1228 = vmatprep.subr.mxu0 0.0
    %1229 = vmatpush1.msra.mxu0 0.0
    %1230 = vmatprep.subr.mxu0 0.0
    %1231 = vmatpush1.msra.mxu0 0.0
    %1232 = vmatprep.subr.mxu0 0.0
    %1233 = vmatpush1.msra.mxu0 0.0
    %1234 = vmatprep.subr.mxu0 0.0
    %1235 = vmatpush1.msra.mxu0 0.0
    %1236 = vmatprep.subr.mxu0 0.0
    %1237 = vmatpush1.msra.mxu0 0.0
    %1238 = vmatprep.subr.mxu0 0.0
    %1239 = vmatpush1.msra.mxu0 0.0
    %1240 = vmatprep.subr.mxu0 0.0
    %1241 = vmatpush1.msra.mxu0 0.0
    %1242 = vmatprep.subr.mxu0 0.0
    %1243 = vmatpush1.msra.mxu0 0.0
    %1244 = vmatprep.subr.mxu0 0.0
    %1245 = vmatpush1.msra.mxu0 0.0
    %1246 = vmatprep.subr.mxu0 0.0
    %1247 = vmatpush1.msra.mxu0 0.0
    %1248 = vmatprep.subr.mxu0 0.0
    %1249 = vmatpush1.msra.mxu0 0.0
    %1250 = vmatprep.subr.mxu0 0.0
    %1251 = vmatpush1.msra.mxu0 0.0
    %1252 = vmatprep.mubr.f32.mxu0 0.0
    %1253 = vmatmul.mubr.f32.gmra.mrb[0].mxu0 %v1186
    %v1254 = vpop.f32.mrb[0].mxu0
    %v1255 = vadd.f32 %v201, %v1254
    %v1256 = vpop.f32.mrb[0].mxu0
    %v1257 = vadd.f32 %v205, %v1256
    %1258 = vdwg.mxu0
    %1259 = vst.msk [vmem:[#allocation10 + $0x4] sm:$0x3] %vm545, %v1257
    %v1260 = vlaneseq
    %v1261 = vshrl.u32 %v1260, 7
    %v1262 = vsub.s32 %v195, %v1261
    %v1263 = vrot.slane %v1053, %v1262
    %v1264 = vlaneseq
    %v1265 = vshrl.u32 %v1264, 7
    %v1266 = vsub.s32 %v195, %v1265
    %v1267 = vrot.slane %v1058, %v1266
    %v1268 = vsel %vm345, %v1267, %v1263
    %1270 = vst.msk [vmem:[%s9 + $0x4] sm:$0x3] %vm348, %v1268
    %v1271 = vsel %vm545, %v1257, -inf
    %1272 = vmax.xlane.f32.xlu0 %v1271
    %v1273 = vpop.xlane.xlu0 %1272
    %vm1274 = vcmp.ge.f32.partialorder %v1257, %v1273
    %v1275 = vsel %vm1274, %v195, 16
    %v1276 = vsel %vm545, %v1275, 2147483647
    %v1277 = vand.u32 %v1276, 65535
    %v1278 = vshra.s32 %v1276, 16
    %v1279 = vcvt.s32.f32 %v1277
    %v1280 = vcvt.s32.f32 %v1278
    %1281 = vmin.xlane.f32.xlu0 %v1280
    %v1282 = vpop.xlane.xlu0 %1281
    %vm1283 = vcmp.eq.f32.partialorder %v1280, %v1282
    %v1284 = vsel %vm1283, %v1279, inf
    %1285 = vmin.xlane.f32.xlu0 %v1284
    %v1286 = vpop.xlane.xlu0 %1285
    %v1287 = vcvt.f32.s32 %v1286
    %v1288 = vcvt.f32.s32 %v1282
    %v1289 = vshll.u32 %v1288, 16
    %v1290 = vadd.s32 %v1289, %v1287
    %vm1291 = vcmp.eq.s32.totalorder %v1290, %v195
    %v1292 = vsel %vm1291, 1, 0
    %v1293 = vcvt.s32.f32 %v1292
    %v1296 = vunpack.c.l.s4 1966171168
    %v1297 = vunpack.c.0.s8 %v1296
    %v1298 = vlaneseq
    %v1299 = vshrl.u32 %v1298, 7
    %v1300 = vsub.s32 %v1297, %v1299
    %v1301 = vrot.slane %v1255, %v1300
    %v1302 = vcombine.high %v1301, %v1301
    %v1304 = vunpack.c.l.s4 1966171168
    %v1305 = vunpack.c.0.s8 %v1304
    %v1306 = vlaneseq
    %v1307 = vshrl.u32 %v1306, 7
    %v1308 = vsub.s32 %v1305, %v1307
    %v1309 = vrot.slane %v1301, %v1308
    %v1311 = vunpack.c.l.s4 1966171168
    %v1312 = vunpack.c.0.s8 %v1311
    %v1313 = vlaneseq
    %v1314 = vshrl.u32 %v1313, 7
    %v1315 = vsub.s32 %v1312, %v1314
    %v1316 = vrot.slane %v1302, %v1315
    %v1317 = vlaneseq
    %v1318 = vshrl.u32 %v1317, 7
    %v1319 = vsub.s32 0, %v1318
    %v1320 = vrot.slane %v1309, %v1319
    %v1321 = vlaneseq
    %v1322 = vshrl.u32 %v1321, 7
    %v1323 = vsub.s32 0, %v1322
    %v1324 = vrot.slane %v1316, %v1323
    %v1327 = vadd.f32 %v1320, %v175
    %v1328 = vadd.f32 %v1324, %v180
    %v1329 = vtanh.pop %v1327
    %v1330 = vtanh.pop %v1328
    %v1331 = vmul.f32 %v1329, %v326
    %v1332 = vmul.f32 %v1330, %v326
    %v1333 = vsel %vm208, %v1331, 0.0
    %1334 = vadd.xlane.f32.xlu0 %v1333
    %v1335 = vpop.xlane.xlu0 %1334
    %v1336 = vsel %vm208, %v1332, 0.0
    %1337 = vadd.xlane.f32.xlu0 %v1336
    %v1338 = vpop.xlane.xlu0 %1337
    %v1341 = vlaneseq
    %v1342 = vshrl.u32 %v1341, 7
    %v1343 = vsub.s32 %v195, %v1342
    %v1344 = vrot.slane %v1335, %v1343
    %v1345 = vlaneseq
    %v1346 = vshrl.u32 %v1345, 7
    %v1347 = vsub.s32 %v195, %v1346
    %v1348 = vrot.slane %v1338, %v1347
    %v1349 = vsel %vm345, %v1348, %v1344
    %v1351 = vsel %vm348, %v1349, -inf
    %1352 = vmax.xlane.f32.xlu0 %v1351
    %v1353 = vpop.xlane.xlu0 %1352
    %v1355 = vlaneseq
    %v1356 = vshrl.u32 %v1355, 7
    %v1357 = vsub.s32 0, %v1356
    %v1358 = vrot.slane %v1353, %v1357
    %v1359 = vlaneseq
    %v1360 = vshrl.u32 %v1359, 7
    %v1361 = vsub.s32 1, %v1360
    %v1362 = vrot.slane %v1353, %v1361
    %v1365 = vsub.f32 %v1335, %v1358
    %v1366 = vsub.f32 %v1338, %v1362
    %v1367 = vmul.f32 %v1365, 1.442695
    %v1368 = vpow.pop %v1367
    %v1369 = vmul.f32 %v1366, 1.442695
    %v1370 = vpow.pop %v1369
    %1373 = vset.pattern.permute.xlu0 0
    %1374 = vperm.xlu0 %1373, %v1368
    %v1375 = vpop.permute.xlu0 %1374
    %1376 = vset.pattern.permute.xlu0 0
    %1377 = vperm.xlu0 %1376, %v1370
    %v1378 = vpop.permute.xlu0 %1377
    %v1379 = vlaneseq
    %v1380 = vshrl.u32 %v1379, 7
    %v1381 = vsub.s32 %v195, %v1380
    %v1382 = vrot.slane %v1375, %v1381
    %v1383 = vlaneseq
    %v1384 = vshrl.u32 %v1383, 7
    %v1385 = vsub.s32 %v195, %v1384
    %v1386 = vrot.slane %v1378, %v1385
    %v1387 = vsel %vm345, %v1386, %v1382
    %v1389 = vsel %vm348, %v1387, 0.0
    %1390 = vadd.xlane.f32.xlu0 %v1389
    %v1391 = vpop.xlane.xlu0 %1390
    %v1392 = vrcp.pop %v1391
    %v1394 = vlaneseq
    %v1395 = vshrl.u32 %v1394, 7
    %v1396 = vsub.s32 0, %v1395
    %v1397 = vrot.slane %v1392, %v1396
    %v1398 = vlaneseq
    %v1399 = vshrl.u32 %v1398, 7
    %v1400 = vsub.s32 1, %v1399
    %v1401 = vrot.slane %v1392, %v1400
    %v1404 = vmul.f32 %v1368, %v1397
    %v1405 = vmul.f32 %v1370, %v1401
    %1407 = vset.pattern.permute.xlu0 0
    %1408 = vperm.xlu0 %1407, %v1404
    %v1409 = vpop.permute.xlu0 %1408
    %1412 = vset.pattern.permute.xlu0 0
    %1413 = vperm.xlu0 %1412, %v1405
    %v1414 = vpop.permute.xlu0 %1413
    %v1416 = vmul.f32 %v1409, %v175
    %v1417 = vmul.f32 %v1414, %v180
    %v1418 = vsel %vm416, %v1416, 0.0
    %v1419 = vrot.slane %v1418, 4
    %v1420 = vadd.f32 %v1418, %v1419
    %v1421 = vrot.slane %v1420, 2
    %v1422 = vadd.f32 %v1420, %v1421
    %v1423 = vrot.slane %v1422, 1
    %v1424 = vadd.f32 %v1422, %v1423
    %v1425 = vsel %vm416, %v1417, 0.0
    %v1426 = vrot.slane %v1425, 4
    %v1427 = vadd.f32 %v1425, %v1426
    %v1428 = vrot.slane %v1427, 2
    %v1429 = vadd.f32 %v1427, %v1428
    %v1430 = vrot.slane %v1429, 1
    %v1431 = vadd.f32 %v1429, %v1430
    %v1434 = vsel %vm345, %v1431, %v1424
    %1435 = vrot.lane.b32.xlu0 %v1434, 96
    %v1436 = vpop.permute.xlu0 %1435
    %v1439 = vsel %vm725, %v1293, 0
    %1441 = vmatprep.subr.mxu0 0.0
    %1442 = vmatpush1.msra.mxu0 %v183
    %1443 = vmatprep.subr.mxu0 0.0
    %1444 = vmatpush1.msra.mxu0 %v184
    %1445 = vmatprep.subr.mxu0 0.0
    %1446 = vmatpush1.msra.mxu0 0.0
    %1447 = vmatprep.subr.mxu0 0.0
    %1448 = vmatpush1.msra.mxu0 0.0
    %1449 = vmatprep.subr.mxu0 0.0
    %1450 = vmatpush1.msra.mxu0 0.0
    %1451 = vmatprep.subr.mxu0 0.0
    %1452 = vmatpush1.msra.mxu0 0.0
    %1453 = vmatprep.subr.mxu0 0.0
    %1454 = vmatpush1.msra.mxu0 0.0
    %1455 = vmatprep.subr.mxu0 0.0
    %1456 = vmatpush1.msra.mxu0 0.0
    %1457 = vmatprep.subr.mxu0 0.0
    %1458 = vmatpush1.msra.mxu0 0.0
    %1459 = vmatprep.subr.mxu0 0.0
    %1460 = vmatpush1.msra.mxu0 0.0
    %1461 = vmatprep.subr.mxu0 0.0
    %1462 = vmatpush1.msra.mxu0 0.0
    %1463 = vmatprep.subr.mxu0 0.0
    %1464 = vmatpush1.msra.mxu0 0.0
    %1465 = vmatprep.subr.mxu0 0.0
    %1466 = vmatpush1.msra.mxu0 0.0
    %1467 = vmatprep.subr.mxu0 0.0
    %1468 = vmatpush1.msra.mxu0 0.0
    %1469 = vmatprep.subr.mxu0 0.0
    %1470 = vmatpush1.msra.mxu0 0.0
    %1471 = vmatprep.subr.mxu0 0.0
    %1472 = vmatpush1.msra.mxu0 0.0
    %1473 = vmatprep.subr.mxu0 0.0
    %1474 = vmatpush1.msra.mxu0 0.0
    %1475 = vmatprep.subr.mxu0 0.0
    %1476 = vmatpush1.msra.mxu0 0.0
    %1477 = vmatprep.subr.mxu0 0.0
    %1478 = vmatpush1.msra.mxu0 0.0
    %1479 = vmatprep.subr.mxu0 0.0
    %1480 = vmatpush1.msra.mxu0 0.0
    %1481 = vmatprep.subr.mxu0 0.0
    %1482 = vmatpush1.msra.mxu0 0.0
    %1483 = vmatprep.subr.mxu0 0.0
    %1484 = vmatpush1.msra.mxu0 0.0
    %1485 = vmatprep.subr.mxu0 0.0
    %1486 = vmatpush1.msra.mxu0 0.0
    %1487 = vmatprep.subr.mxu0 0.0
    %1488 = vmatpush1.msra.mxu0 0.0
    %1489 = vmatprep.subr.mxu0 0.0
    %1490 = vmatpush1.msra.mxu0 0.0
    %1491 = vmatprep.subr.mxu0 0.0
    %1492 = vmatpush1.msra.mxu0 0.0
    %1493 = vmatprep.subr.mxu0 0.0
    %1494 = vmatpush1.msra.mxu0 0.0
    %1495 = vmatprep.subr.mxu0 0.0
    %1496 = vmatpush1.msra.mxu0 0.0
    %1497 = vmatprep.subr.mxu0 0.0
    %1498 = vmatpush1.msra.mxu0 0.0
    %1499 = vmatprep.subr.mxu0 0.0
    %1500 = vmatpush1.msra.mxu0 0.0
    %1501 = vmatprep.subr.mxu0 0.0
    %1502 = vmatpush1.msra.mxu0 0.0
    %1503 = vmatprep.subr.mxu0 0.0
    %1504 = vmatpush1.msra.mxu0 0.0
    %1505 = vmatprep.mubr.f32.mxu0 0.0
    %1506 = vmatmul.mubr.f32.gmra.mrb[0].mxu0 %v1439
    %v1507 = vpop.f32.mrb[0].mxu0
    %v1508 = vadd.f32 %v1436, %v1507
    %v1509 = vpop.f32.mrb[0].mxu0
    %1510 = vdwg.mxu0
    %1511 = vrot.lane.b32.xlu0 %v1255, 96
    %v1512 = vpop.permute.xlu0 %1511
    %v1514 = vadd.f32 %v1508, %v1512
    %v1515 = vxor.u32 %v1514, 2147483648
    %v1516 = vmul.f32 %v1515, 1.442695
    %v1517 = vpow.pop %v1516
    %v1518 = vadd.f32 %v1517, 1.0
    %v1519 = vrcp.pop %v1518
    %v1520 = vmul.f32 1.0, %v1519
    %1521 = vrot.lane.b32.xlu0 %v1255, 32
    %v1522 = vpop.permute.xlu0 %1521
    %v1524 = vmul.f32 %v1520, %v1522
    %1526 = vrot.lane.b32.xlu0 %v1524, 64
    %v1527 = vpop.permute.xlu0 %1526
    %v1529 = vadd.f32 %v1508, %v1527
    %v1530 = vtanh.pop %v1529
    %v1531 = vsub.f32 1.0, %v1520
    %1533 = vrot.lane.b32.xlu0 %v1530, 96
    %v1534 = vpop.permute.xlu0 %1533
    %v1536 = vmul.f32 %v1531, %v1534
    %v1537 = vmul.f32 %v1520, %v1182
    %v1538 = vadd.f32 %v1536, %v1537
    %1540 = vrot.lane.b32.xlu0 %v1538, 96
    %v1541 = vpop.permute.xlu0 %1540
    %v1542 = vsel %vm208, %v1541, 0
    %1544 = vmatprep.subr.mxu0 %v186
    %1545 = vmatpush1.msra.mxu0 %v185
    %1546 = vmatprep.subr.mxu0 %v188
    %1547 = vmatpush1.msra.mxu0 %v187
    %1548 = vmatprep.subr.mxu0 %v190
    %1549 = vmatpush1.msra.mxu0 %v189
    %1550 = vmatprep.subr.mxu0 %v192
    %1551 = vmatpush1.msra.mxu0 %v191
    %1552 = vmatprep.subr.mxu0 0.0
    %1553 = vmatpush1.msra.mxu0 0.0
    %1554 = vmatprep.subr.mxu0 0.0
    %1555 = vmatpush1.msra.mxu0 0.0
    %1556 = vmatprep.subr.mxu0 0.0
    %1557 = vmatpush1.msra.mxu0 0.0
    %1558 = vmatprep.subr.mxu0 0.0
    %1559 = vmatpush1.msra.mxu0 0.0
    %1560 = vmatprep.subr.mxu0 0.0
    %1561 = vmatpush1.msra.mxu0 0.0
    %1562 = vmatprep.subr.mxu0 0.0
    %1563 = vmatpush1.msra.mxu0 0.0
    %1564 = vmatprep.subr.mxu0 0.0
    %1565 = vmatpush1.msra.mxu0 0.0
    %1566 = vmatprep.subr.mxu0 0.0
    %1567 = vmatpush1.msra.mxu0 0.0
    %1568 = vmatprep.subr.mxu0 0.0
    %1569 = vmatpush1.msra.mxu0 0.0
    %1570 = vmatprep.subr.mxu0 0.0
    %1571 = vmatpush1.msra.mxu0 0.0
    %1572 = vmatprep.subr.mxu0 0.0
    %1573 = vmatpush1.msra.mxu0 0.0
    %1574 = vmatprep.subr.mxu0 0.0
    %1575 = vmatpush1.msra.mxu0 0.0
    %1576 = vmatprep.subr.mxu0 0.0
    %1577 = vmatpush1.msra.mxu0 0.0
    %1578 = vmatprep.subr.mxu0 0.0
    %1579 = vmatpush1.msra.mxu0 0.0
    %1580 = vmatprep.subr.mxu0 0.0
    %1581 = vmatpush1.msra.mxu0 0.0
    %1582 = vmatprep.subr.mxu0 0.0
    %1583 = vmatpush1.msra.mxu0 0.0
    %1584 = vmatprep.subr.mxu0 0.0
    %1585 = vmatpush1.msra.mxu0 0.0
    %1586 = vmatprep.subr.mxu0 0.0
    %1587 = vmatpush1.msra.mxu0 0.0
    %1588 = vmatprep.subr.mxu0 0.0
    %1589 = vmatpush1.msra.mxu0 0.0
    %1590 = vmatprep.subr.mxu0 0.0
    %1591 = vmatpush1.msra.mxu0 0.0
    %1592 = vmatprep.subr.mxu0 0.0
    %1593 = vmatpush1.msra.mxu0 0.0
    %1594 = vmatprep.subr.mxu0 0.0
    %1595 = vmatpush1.msra.mxu0 0.0
    %1596 = vmatprep.subr.mxu0 0.0
    %1597 = vmatpush1.msra.mxu0 0.0
    %1598 = vmatprep.subr.mxu0 0.0
    %1599 = vmatpush1.msra.mxu0 0.0
    %1600 = vmatprep.subr.mxu0 0.0
    %1601 = vmatpush1.msra.mxu0 0.0
    %1602 = vmatprep.subr.mxu0 0.0
    %1603 = vmatpush1.msra.mxu0 0.0
    %1604 = vmatprep.subr.mxu0 0.0
    %1605 = vmatpush1.msra.mxu0 0.0
    %1606 = vmatprep.subr.mxu0 0.0
    %1607 = vmatpush1.msra.mxu0 0.0
    %1608 = vmatprep.mubr.f32.mxu0 0.0
    %1609 = vmatmul.mubr.f32.gmra.mrb[0].mxu0 %v1542
    %v1610 = vpop.f32.mrb[0].mxu0
    %v1611 = vadd.f32 %v201, %v1610
    %v1612 = vpop.f32.mrb[0].mxu0
    %v1613 = vadd.f32 %v205, %v1612
    %1614 = vdwg.mxu0
    %1615 = vst.msk [vmem:[#allocation10 + $0x6] sm:$0x3] %vm545, %v1613
    %v1616 = vlaneseq
    %v1617 = vshrl.u32 %v1616, 7
    %v1618 = vsub.s32 %v195, %v1617
    %v1619 = vrot.slane %v1409, %v1618
    %v1620 = vlaneseq
    %v1621 = vshrl.u32 %v1620, 7
    %v1622 = vsub.s32 %v195, %v1621
    %v1623 = vrot.slane %v1414, %v1622
    %v1624 = vsel %vm345, %v1623, %v1619
    %1626 = vst.msk [vmem:[%s9 + $0x6] sm:$0x3] %vm348, %v1624
    %v1627 = vsel %vm545, %v1613, -inf
    %1628 = vmax.xlane.f32.xlu0 %v1627
    %v1629 = vpop.xlane.xlu0 %1628
    %vm1630 = vcmp.ge.f32.partialorder %v1613, %v1629
    %v1631 = vsel %vm1630, %v195, 16
    %v1632 = vsel %vm545, %v1631, 2147483647
    %v1633 = vand.u32 %v1632, 65535
    %v1634 = vshra.s32 %v1632, 16
    %v1635 = vcvt.s32.f32 %v1633
    %v1636 = vcvt.s32.f32 %v1634
    %1637 = vmin.xlane.f32.xlu0 %v1636
    %v1638 = vpop.xlane.xlu0 %1637
    %vm1639 = vcmp.eq.f32.partialorder %v1636, %v1638
    %v1640 = vsel %vm1639, %v1635, inf
    %1641 = vmin.xlane.f32.xlu0 %v1640
    %v1642 = vpop.xlane.xlu0 %1641
    %v1643 = vcvt.f32.s32 %v1642
    %v1644 = vcvt.f32.s32 %v1638
    %v1645 = vshll.u32 %v1644, 16
    %v1646 = vadd.s32 %v1645, %v1643
    %vm1647 = vcmp.eq.s32.totalorder %v1646, %v195
    %v1648 = vsel %vm1647, 1, 0
    %v1649 = vcvt.s32.f32 %v1648
    %v1652 = vunpack.c.l.s4 1966171168
    %v1653 = vunpack.c.0.s8 %v1652
    %v1654 = vlaneseq
    %v1655 = vshrl.u32 %v1654, 7
    %v1656 = vsub.s32 %v1653, %v1655
    %v1657 = vrot.slane %v1611, %v1656
    %v1658 = vcombine.high %v1657, %v1657
    %v1660 = vunpack.c.l.s4 1966171168
    %v1661 = vunpack.c.0.s8 %v1660
    %v1662 = vlaneseq
    %v1663 = vshrl.u32 %v1662, 7
    %v1664 = vsub.s32 %v1661, %v1663
    %v1665 = vrot.slane %v1657, %v1664
    %v1667 = vunpack.c.l.s4 1966171168
    %v1668 = vunpack.c.0.s8 %v1667
    %v1669 = vlaneseq
    %v1670 = vshrl.u32 %v1669, 7
    %v1671 = vsub.s32 %v1668, %v1670
    %v1672 = vrot.slane %v1658, %v1671
    %v1673 = vlaneseq
    %v1674 = vshrl.u32 %v1673, 7
    %v1675 = vsub.s32 0, %v1674
    %v1676 = vrot.slane %v1665, %v1675
    %v1677 = vlaneseq
    %v1678 = vshrl.u32 %v1677, 7
    %v1679 = vsub.s32 0, %v1678
    %v1680 = vrot.slane %v1672, %v1679
    %v1683 = vadd.f32 %v1676, %v175
    %v1684 = vadd.f32 %v1680, %v180
    %v1685 = vtanh.pop %v1683
    %v1686 = vtanh.pop %v1684
    %v1687 = vmul.f32 %v1685, %v326
    %v1688 = vmul.f32 %v1686, %v326
    %v1689 = vsel %vm208, %v1687, 0.0
    %1690 = vadd.xlane.f32.xlu0 %v1689
    %v1691 = vpop.xlane.xlu0 %1690
    %v1692 = vsel %vm208, %v1688, 0.0
    %1693 = vadd.xlane.f32.xlu0 %v1692
    %v1694 = vpop.xlane.xlu0 %1693
    %v1697 = vlaneseq
    %v1698 = vshrl.u32 %v1697, 7
    %v1699 = vsub.s32 %v195, %v1698
    %v1700 = vrot.slane %v1691, %v1699
    %v1701 = vlaneseq
    %v1702 = vshrl.u32 %v1701, 7
    %v1703 = vsub.s32 %v195, %v1702
    %v1704 = vrot.slane %v1694, %v1703
    %v1705 = vsel %vm345, %v1704, %v1700
    %v1707 = vsel %vm348, %v1705, -inf
    %1708 = vmax.xlane.f32.xlu0 %v1707
    %v1709 = vpop.xlane.xlu0 %1708
    %v1711 = vlaneseq
    %v1712 = vshrl.u32 %v1711, 7
    %v1713 = vsub.s32 0, %v1712
    %v1714 = vrot.slane %v1709, %v1713
    %v1715 = vlaneseq
    %v1716 = vshrl.u32 %v1715, 7
    %v1717 = vsub.s32 1, %v1716
    %v1718 = vrot.slane %v1709, %v1717
    %v1721 = vsub.f32 %v1691, %v1714
    %v1722 = vsub.f32 %v1694, %v1718
    %v1723 = vmul.f32 %v1721, 1.442695
    %v1724 = vpow.pop %v1723
    %v1725 = vmul.f32 %v1722, 1.442695
    %v1726 = vpow.pop %v1725
    %1729 = vset.pattern.permute.xlu0 0
    %1730 = vperm.xlu0 %1729, %v1724
    %v1731 = vpop.permute.xlu0 %1730
    %1732 = vset.pattern.permute.xlu0 0
    %1733 = vperm.xlu0 %1732, %v1726
    %v1734 = vpop.permute.xlu0 %1733
    %v1735 = vlaneseq
    %v1736 = vshrl.u32 %v1735, 7
    %v1737 = vsub.s32 %v195, %v1736
    %v1738 = vrot.slane %v1731, %v1737
    %v1739 = vlaneseq
    %v1740 = vshrl.u32 %v1739, 7
    %v1741 = vsub.s32 %v195, %v1740
    %v1742 = vrot.slane %v1734, %v1741
    %v1743 = vsel %vm345, %v1742, %v1738
    %v1745 = vsel %vm348, %v1743, 0.0
    %1746 = vadd.xlane.f32.xlu0 %v1745
    %v1747 = vpop.xlane.xlu0 %1746
    %v1748 = vrcp.pop %v1747
    %v1750 = vlaneseq
    %v1751 = vshrl.u32 %v1750, 7
    %v1752 = vsub.s32 0, %v1751
    %v1753 = vrot.slane %v1748, %v1752
    %v1754 = vlaneseq
    %v1755 = vshrl.u32 %v1754, 7
    %v1756 = vsub.s32 1, %v1755
    %v1757 = vrot.slane %v1748, %v1756
    %v1760 = vmul.f32 %v1724, %v1753
    %v1761 = vmul.f32 %v1726, %v1757
    %1763 = vset.pattern.permute.xlu0 0
    %1764 = vperm.xlu0 %1763, %v1760
    %v1765 = vpop.permute.xlu0 %1764
    %1768 = vset.pattern.permute.xlu0 0
    %1769 = vperm.xlu0 %1768, %v1761
    %v1770 = vpop.permute.xlu0 %1769
    %v1772 = vmul.f32 %v1765, %v175
    %v1773 = vmul.f32 %v1770, %v180
    %v1774 = vsel %vm416, %v1772, 0.0
    %v1775 = vrot.slane %v1774, 4
    %v1776 = vadd.f32 %v1774, %v1775
    %v1777 = vrot.slane %v1776, 2
    %v1778 = vadd.f32 %v1776, %v1777
    %v1779 = vrot.slane %v1778, 1
    %v1780 = vadd.f32 %v1778, %v1779
    %v1781 = vsel %vm416, %v1773, 0.0
    %v1782 = vrot.slane %v1781, 4
    %v1783 = vadd.f32 %v1781, %v1782
    %v1784 = vrot.slane %v1783, 2
    %v1785 = vadd.f32 %v1783, %v1784
    %v1786 = vrot.slane %v1785, 1
    %v1787 = vadd.f32 %v1785, %v1786
    %v1790 = vsel %vm345, %v1787, %v1780
    %1791 = vrot.lane.b32.xlu0 %v1790, 96
    %v1792 = vpop.permute.xlu0 %1791
    %v1795 = vsel %vm725, %v1649, 0
    %1797 = vmatprep.subr.mxu0 0.0
    %1798 = vmatpush1.msra.mxu0 %v183
    %1799 = vmatprep.subr.mxu0 0.0
    %1800 = vmatpush1.msra.mxu0 %v184
    %1801 = vmatprep.subr.mxu0 0.0
    %1802 = vmatpush1.msra.mxu0 0.0
    %1803 = vmatprep.subr.mxu0 0.0
    %1804 = vmatpush1.msra.mxu0 0.0
    %1805 = vmatprep.subr.mxu0 0.0
    %1806 = vmatpush1.msra.mxu0 0.0
    %1807 = vmatprep.subr.mxu0 0.0
    %1808 = vmatpush1.msra.mxu0 0.0
    %1809 = vmatprep.subr.mxu0 0.0
    %1810 = vmatpush1.msra.mxu0 0.0
    %1811 = vmatprep.subr.mxu0 0.0
    %1812 = vmatpush1.msra.mxu0 0.0
    %1813 = vmatprep.subr.mxu0 0.0
    %1814 = vmatpush1.msra.mxu0 0.0
    %1815 = vmatprep.subr.mxu0 0.0
    %1816 = vmatpush1.msra.mxu0 0.0
    %1817 = vmatprep.subr.mxu0 0.0
    %1818 = vmatpush1.msra.mxu0 0.0
    %1819 = vmatprep.subr.mxu0 0.0
    %1820 = vmatpush1.msra.mxu0 0.0
    %1821 = vmatprep.subr.mxu0 0.0
    %1822 = vmatpush1.msra.mxu0 0.0
    %1823 = vmatprep.subr.mxu0 0.0
    %1824 = vmatpush1.msra.mxu0 0.0
    %1825 = vmatprep.subr.mxu0 0.0
    %1826 = vmatpush1.msra.mxu0 0.0
    %1827 = vmatprep.subr.mxu0 0.0
    %1828 = vmatpush1.msra.mxu0 0.0
    %1829 = vmatprep.subr.mxu0 0.0
    %1830 = vmatpush1.msra.mxu0 0.0
    %1831 = vmatprep.subr.mxu0 0.0
    %1832 = vmatpush1.msra.mxu0 0.0
    %1833 = vmatprep.subr.mxu0 0.0
    %1834 = vmatpush1.msra.mxu0 0.0
    %1835 = vmatprep.subr.mxu0 0.0
    %1836 = vmatpush1.msra.mxu0 0.0
    %1837 = vmatprep.subr.mxu0 0.0
    %1838 = vmatpush1.msra.mxu0 0.0
    %1839 = vmatprep.subr.mxu0 0.0
    %1840 = vmatpush1.msra.mxu0 0.0
    %1841 = vmatprep.subr.mxu0 0.0
    %1842 = vmatpush1.msra.mxu0 0.0
    %1843 = vmatprep.subr.mxu0 0.0
    %1844 = vmatpush1.msra.mxu0 0.0
    %1845 = vmatprep.subr.mxu0 0.0
    %1846 = vmatpush1.msra.mxu0 0.0
    %1847 = vmatprep.subr.mxu0 0.0
    %1848 = vmatpush1.msra.mxu0 0.0
    %1849 = vmatprep.subr.mxu0 0.0
    %1850 = vmatpush1.msra.mxu0 0.0
    %1851 = vmatprep.subr.mxu0 0.0
    %1852 = vmatpush1.msra.mxu0 0.0
    %1853 = vmatprep.subr.mxu0 0.0
    %1854 = vmatpush1.msra.mxu0 0.0
    %1855 = vmatprep.subr.mxu0 0.0
    %1856 = vmatpush1.msra.mxu0 0.0
    %1857 = vmatprep.subr.mxu0 0.0
    %1858 = vmatpush1.msra.mxu0 0.0
    %1859 = vmatprep.subr.mxu0 0.0
    %1860 = vmatpush1.msra.mxu0 0.0
    %1861 = vmatprep.mubr.f32.mxu0 0.0
    %1862 = vmatmul.mubr.f32.gmra.mrb[0].mxu0 %v1795
    %v1863 = vpop.f32.mrb[0].mxu0
    %v1864 = vadd.f32 %v1792, %v1863
    %v1865 = vpop.f32.mrb[0].mxu0
    %1866 = vdwg.mxu0
    %1867 = vrot.lane.b32.xlu0 %v1611, 96
    %v1868 = vpop.permute.xlu0 %1867
    %v1870 = vadd.f32 %v1864, %v1868
    %v1871 = vxor.u32 %v1870, 2147483648
    %v1872 = vmul.f32 %v1871, 1.442695
    %v1873 = vpow.pop %v1872
    %v1874 = vadd.f32 %v1873, 1.0
    %v1875 = vrcp.pop %v1874
    %v1876 = vmul.f32 1.0, %v1875
    %1877 = vrot.lane.b32.xlu0 %v1611, 32
    %v1878 = vpop.permute.xlu0 %1877
    %v1880 = vmul.f32 %v1876, %v1878
    %1882 = vrot.lane.b32.xlu0 %v1880, 64
    %v1883 = vpop.permute.xlu0 %1882
    %v1885 = vadd.f32 %v1864, %v1883
    %v1886 = vtanh.pop %v1885
    %v1887 = vsub.f32 1.0, %v1876
    %1889 = vrot.lane.b32.xlu0 %v1886, 96
    %v1890 = vpop.permute.xlu0 %1889
    %v1892 = vmul.f32 %v1887, %v1890
    %v1893 = vmul.f32 %v1876, %v1538
    %v1894 = vadd.f32 %v1892, %v1893
    %1896 = vrot.lane.b32.xlu0 %v1894, 96
    %v1897 = vpop.permute.xlu0 %1896
    %v1898 = vsel %vm208, %v1897, 0
    %1900 = vmatprep.subr.mxu0 %v186
    %1901 = vmatpush1.msra.mxu0 %v185
    %1902 = vmatprep.subr.mxu0 %v188
    %1903 = vmatpush1.msra.mxu0 %v187
    %1904 = vmatprep.subr.mxu0 %v190
    %1905 = vmatpush1.msra.mxu0 %v189
    %1906 = vmatprep.subr.mxu0 %v192
    %1907 = vmatpush1.msra.mxu0 %v191
    %1908 = vmatprep.subr.mxu0 0.0
    %1909 = vmatpush1.msra.mxu0 0.0
    %1910 = vmatprep.subr.mxu0 0.0
    %1911 = vmatpush1.msra.mxu0 0.0
    %1912 = vmatprep.subr.mxu0 0.0
    %1913 = vmatpush1.msra.mxu0 0.0
    %1914 = vmatprep.subr.mxu0 0.0
    %1915 = vmatpush1.msra.mxu0 0.0
    %1916 = vmatprep.subr.mxu0 0.0
    %1917 = vmatpush1.msra.mxu0 0.0
    %1918 = vmatprep.subr.mxu0 0.0
    %1919 = vmatpush1.msra.mxu0 0.0
    %1920 = vmatprep.subr.mxu0 0.0
    %1921 = vmatpush1.msra.mxu0 0.0
    %1922 = vmatprep.subr.mxu0 0.0
    %1923 = vmatpush1.msra.mxu0 0.0
    %1924 = vmatprep.subr.mxu0 0.0
    %1925 = vmatpush1.msra.mxu0 0.0
    %1926 = vmatprep.subr.mxu0 0.0
    %1927 = vmatpush1.msra.mxu0 0.0
    %1928 = vmatprep.subr.mxu0 0.0
    %1929 = vmatpush1.msra.mxu0 0.0
    %1930 = vmatprep.subr.mxu0 0.0
    %1931 = vmatpush1.msra.mxu0 0.0
    %1932 = vmatprep.subr.mxu0 0.0
    %1933 = vmatpush1.msra.mxu0 0.0
    %1934 = vmatprep.subr.mxu0 0.0
    %1935 = vmatpush1.msra.mxu0 0.0
    %1936 = vmatprep.subr.mxu0 0.0
    %1937 = vmatpush1.msra.mxu0 0.0
    %1938 = vmatprep.subr.mxu0 0.0
    %1939 = vmatpush1.msra.mxu0 0.0
    %1940 = vmatprep.subr.mxu0 0.0
    %1941 = vmatpush1.msra.mxu0 0.0
    %1942 = vmatprep.subr.mxu0 0.0
    %1943 = vmatpush1.msra.mxu0 0.0
    %1944 = vmatprep.subr.mxu0 0.0
    %1945 = vmatpush1.msra.mxu0 0.0
    %1946 = vmatprep.subr.mxu0 0.0
    %1947 = vmatpush1.msra.mxu0 0.0
    %1948 = vmatprep.subr.mxu0 0.0
    %1949 = vmatpush1.msra.mxu0 0.0
    %1950 = vmatprep.subr.mxu0 0.0
    %1951 = vmatpush1.msra.mxu0 0.0
    %1952 = vmatprep.subr.mxu0 0.0
    %1953 = vmatpush1.msra.mxu0 0.0
    %1954 = vmatprep.subr.mxu0 0.0
    %1955 = vmatpush1.msra.mxu0 0.0
    %1956 = vmatprep.subr.mxu0 0.0
    %1957 = vmatpush1.msra.mxu0 0.0
    %1958 = vmatprep.subr.mxu0 0.0
    %1959 = vmatpush1.msra.mxu0 0.0
    %1960 = vmatprep.subr.mxu0 0.0
    %1961 = vmatpush1.msra.mxu0 0.0
    %1962 = vmatprep.subr.mxu0 0.0
    %1963 = vmatpush1.msra.mxu0 0.0
    %1964 = vmatprep.mubr.f32.mxu0 0.0
    %1965 = vmatmul.mubr.f32.gmra.mrb[0].mxu0 %v1898
    %v1966 = vpop.f32.mrb[0].mxu0
    %v1967 = vadd.f32 %v201, %v1966
    %v1968 = vpop.f32.mrb[0].mxu0
    %v1969 = vadd.f32 %v205, %v1968
    %1970 = vdwg.mxu0
    %1971 = vst.msk [vmem:[#allocation10 + $0x8] sm:$0x3] %vm545, %v1969
    %v1972 = vlaneseq
    %v1973 = vshrl.u32 %v1972, 7
    %v1974 = vsub.s32 %v195, %v1973
    %v1975 = vrot.slane %v1765, %v1974
    %v1976 = vlaneseq
    %v1977 = vshrl.u32 %v1976, 7
    %v1978 = vsub.s32 %v195, %v1977
    %v1979 = vrot.slane %v1770, %v1978
    %v1980 = vsel %vm345, %v1979, %v1975
    %1982 = vst.msk [vmem:[%s9 + $0x8] sm:$0x3] %vm348, %v1980
    %v1983 = vsel %vm545, %v1969, -inf
    %1984 = vmax.xlane.f32.xlu0 %v1983
    %v1985 = vpop.xlane.xlu0 %1984
    %vm1986 = vcmp.ge.f32.partialorder %v1969, %v1985
    %v1987 = vsel %vm1986, %v195, 16
    %v1988 = vsel %vm545, %v1987, 2147483647
    %v1989 = vand.u32 %v1988, 65535
    %v1990 = vshra.s32 %v1988, 16
    %v1991 = vcvt.s32.f32 %v1989
    %v1992 = vcvt.s32.f32 %v1990
    %1993 = vmin.xlane.f32.xlu0 %v1992
    %v1994 = vpop.xlane.xlu0 %1993
    %vm1995 = vcmp.eq.f32.partialorder %v1992, %v1994
    %v1996 = vsel %vm1995, %v1991, inf
    %1997 = vmin.xlane.f32.xlu0 %v1996
    %v1998 = vpop.xlane.xlu0 %1997
    %v1999 = vcvt.f32.s32 %v1998
    %v2000 = vcvt.f32.s32 %v1994
    %v2001 = vshll.u32 %v2000, 16
    %v2002 = vadd.s32 %v2001, %v1999
    %vm2003 = vcmp.eq.s32.totalorder %v2002, %v195
    %v2004 = vsel %vm2003, 1, 0
    %v2005 = vcvt.s32.f32 %v2004
    %v2008 = vunpack.c.l.s4 1966171168
    %v2009 = vunpack.c.0.s8 %v2008
    %v2010 = vlaneseq
    %v2011 = vshrl.u32 %v2010, 7
    %v2012 = vsub.s32 %v2009, %v2011
    %v2013 = vrot.slane %v1967, %v2012
    %v2014 = vcombine.high %v2013, %v2013
    %v2016 = vunpack.c.l.s4 1966171168
    %v2017 = vunpack.c.0.s8 %v2016
    %v2018 = vlaneseq
    %v2019 = vshrl.u32 %v2018, 7
    %v2020 = vsub.s32 %v2017, %v2019
    %v2021 = vrot.slane %v2013, %v2020
    %v2023 = vunpack.c.l.s4 1966171168
    %v2024 = vunpack.c.0.s8 %v2023
    %v2025 = vlaneseq
    %v2026 = vshrl.u32 %v2025, 7
    %v2027 = vsub.s32 %v2024, %v2026
    %v2028 = vrot.slane %v2014, %v2027
    %v2029 = vlaneseq
    %v2030 = vshrl.u32 %v2029, 7
    %v2031 = vsub.s32 0, %v2030
    %v2032 = vrot.slane %v2021, %v2031
    %v2033 = vlaneseq
    %v2034 = vshrl.u32 %v2033, 7
    %v2035 = vsub.s32 0, %v2034
    %v2036 = vrot.slane %v2028, %v2035
    %v2039 = vadd.f32 %v2032, %v175
    %v2040 = vadd.f32 %v2036, %v180
    %v2041 = vtanh.pop %v2039
    %v2042 = vtanh.pop %v2040
    %v2043 = vmul.f32 %v2041, %v326
    %v2044 = vmul.f32 %v2042, %v326
    %v2045 = vsel %vm208, %v2043, 0.0
    %2046 = vadd.xlane.f32.xlu0 %v2045
    %v2047 = vpop.xlane.xlu0 %2046
    %v2048 = vsel %vm208, %v2044, 0.0
    %2049 = vadd.xlane.f32.xlu0 %v2048
    %v2050 = vpop.xlane.xlu0 %2049
    %v2053 = vlaneseq
    %v2054 = vshrl.u32 %v2053, 7
    %v2055 = vsub.s32 %v195, %v2054
    %v2056 = vrot.slane %v2047, %v2055
    %v2057 = vlaneseq
    %v2058 = vshrl.u32 %v2057, 7
    %v2059 = vsub.s32 %v195, %v2058
    %v2060 = vrot.slane %v2050, %v2059
    %v2061 = vsel %vm345, %v2060, %v2056
    %v2063 = vsel %vm348, %v2061, -inf
    %2064 = vmax.xlane.f32.xlu0 %v2063
    %v2065 = vpop.xlane.xlu0 %2064
    %v2067 = vlaneseq
    %v2068 = vshrl.u32 %v2067, 7
    %v2069 = vsub.s32 0, %v2068
    %v2070 = vrot.slane %v2065, %v2069
    %v2071 = vlaneseq
    %v2072 = vshrl.u32 %v2071, 7
    %v2073 = vsub.s32 1, %v2072
    %v2074 = vrot.slane %v2065, %v2073
    %v2077 = vsub.f32 %v2047, %v2070
    %v2078 = vsub.f32 %v2050, %v2074
    %v2079 = vmul.f32 %v2077, 1.442695
    %v2080 = vpow.pop %v2079
    %v2081 = vmul.f32 %v2078, 1.442695
    %v2082 = vpow.pop %v2081
    %2085 = vset.pattern.permute.xlu0 0
    %2086 = vperm.xlu0 %2085, %v2080
    %v2087 = vpop.permute.xlu0 %2086
    %2088 = vset.pattern.permute.xlu0 0
    %2089 = vperm.xlu0 %2088, %v2082
    %v2090 = vpop.permute.xlu0 %2089
    %v2091 = vlaneseq
    %v2092 = vshrl.u32 %v2091, 7
    %v2093 = vsub.s32 %v195, %v2092
    %v2094 = vrot.slane %v2087, %v2093
    %v2095 = vlaneseq
    %v2096 = vshrl.u32 %v2095, 7
    %v2097 = vsub.s32 %v195, %v2096
    %v2098 = vrot.slane %v2090, %v2097
    %v2099 = vsel %vm345, %v2098, %v2094
    %v2101 = vsel %vm348, %v2099, 0.0
    %2102 = vadd.xlane.f32.xlu0 %v2101
    %v2103 = vpop.xlane.xlu0 %2102
    %v2104 = vrcp.pop %v2103
    %v2106 = vlaneseq
    %v2107 = vshrl.u32 %v2106, 7
    %v2108 = vsub.s32 0, %v2107
    %v2109 = vrot.slane %v2104, %v2108
    %v2110 = vlaneseq
    %v2111 = vshrl.u32 %v2110, 7
    %v2112 = vsub.s32 1, %v2111
    %v2113 = vrot.slane %v2104, %v2112
    %v2116 = vmul.f32 %v2080, %v2109
    %v2117 = vmul.f32 %v2082, %v2113
    %2119 = vset.pattern.permute.xlu0 0
    %2120 = vperm.xlu0 %2119, %v2116
    %v2121 = vpop.permute.xlu0 %2120
    %2124 = vset.pattern.permute.xlu0 0
    %2125 = vperm.xlu0 %2124, %v2117
    %v2126 = vpop.permute.xlu0 %2125
    %v2128 = vmul.f32 %v2121, %v175
    %v2129 = vmul.f32 %v2126, %v180
    %v2130 = vsel %vm416, %v2128, 0.0
    %v2131 = vrot.slane %v2130, 4
    %v2132 = vadd.f32 %v2130, %v2131
    %v2133 = vrot.slane %v2132, 2
    %v2134 = vadd.f32 %v2132, %v2133
    %v2135 = vrot.slane %v2134, 1
    %v2136 = vadd.f32 %v2134, %v2135
    %v2137 = vsel %vm416, %v2129, 0.0
    %v2138 = vrot.slane %v2137, 4
    %v2139 = vadd.f32 %v2137, %v2138
    %v2140 = vrot.slane %v2139, 2
    %v2141 = vadd.f32 %v2139, %v2140
    %v2142 = vrot.slane %v2141, 1
    %v2143 = vadd.f32 %v2141, %v2142
    %v2146 = vsel %vm345, %v2143, %v2136
    %2147 = vrot.lane.b32.xlu0 %v2146, 96
    %v2148 = vpop.permute.xlu0 %2147
    %v2151 = vsel %vm725, %v2005, 0
    %2153 = vmatprep.subr.mxu0 0.0
    %2154 = vmatpush1.msra.mxu0 %v183
    %2155 = vmatprep.subr.mxu0 0.0
    %2156 = vmatpush1.msra.mxu0 %v184
    %2157 = vmatprep.subr.mxu0 0.0
    %2158 = vmatpush1.msra.mxu0 0.0
    %2159 = vmatprep.subr.mxu0 0.0
    %2160 = vmatpush1.msra.mxu0 0.0
    %2161 = vmatprep.subr.mxu0 0.0
    %2162 = vmatpush1.msra.mxu0 0.0
    %2163 = vmatprep.subr.mxu0 0.0
    %2164 = vmatpush1.msra.mxu0 0.0
    %2165 = vmatprep.subr.mxu0 0.0
    %2166 = vmatpush1.msra.mxu0 0.0
    %2167 = vmatprep.subr.mxu0 0.0
    %2168 = vmatpush1.msra.mxu0 0.0
    %2169 = vmatprep.subr.mxu0 0.0
    %2170 = vmatpush1.msra.mxu0 0.0
    %2171 = vmatprep.subr.mxu0 0.0
    %2172 = vmatpush1.msra.mxu0 0.0
    %2173 = vmatprep.subr.mxu0 0.0
    %2174 = vmatpush1.msra.mxu0 0.0
    %2175 = vmatprep.subr.mxu0 0.0
    %2176 = vmatpush1.msra.mxu0 0.0
    %2177 = vmatprep.subr.mxu0 0.0
    %2178 = vmatpush1.msra.mxu0 0.0
    %2179 = vmatprep.subr.mxu0 0.0
    %2180 = vmatpush1.msra.mxu0 0.0
    %2181 = vmatprep.subr.mxu0 0.0
    %2182 = vmatpush1.msra.mxu0 0.0
    %2183 = vmatprep.subr.mxu0 0.0
    %2184 = vmatpush1.msra.mxu0 0.0
    %2185 = vmatprep.subr.mxu0 0.0
    %2186 = vmatpush1.msra.mxu0 0.0
    %2187 = vmatprep.subr.mxu0 0.0
    %2188 = vmatpush1.msra.mxu0 0.0
    %2189 = vmatprep.subr.mxu0 0.0
    %2190 = vmatpush1.msra.mxu0 0.0
    %2191 = vmatprep.subr.mxu0 0.0
    %2192 = vmatpush1.msra.mxu0 0.0
    %2193 = vmatprep.subr.mxu0 0.0
    %2194 = vmatpush1.msra.mxu0 0.0
    %2195 = vmatprep.subr.mxu0 0.0
    %2196 = vmatpush1.msra.mxu0 0.0
    %2197 = vmatprep.subr.mxu0 0.0
    %2198 = vmatpush1.msra.mxu0 0.0
    %2199 = vmatprep.subr.mxu0 0.0
    %2200 = vmatpush1.msra.mxu0 0.0
    %2201 = vmatprep.subr.mxu0 0.0
    %2202 = vmatpush1.msra.mxu0 0.0
    %2203 = vmatprep.subr.mxu0 0.0
    %2204 = vmatpush1.msra.mxu0 0.0
    %2205 = vmatprep.subr.mxu0 0.0
    %2206 = vmatpush1.msra.mxu0 0.0
    %2207 = vmatprep.subr.mxu0 0.0
    %2208 = vmatpush1.msra.mxu0 0.0
    %2209 = vmatprep.subr.mxu0 0.0
    %2210 = vmatpush1.msra.mxu0 0.0
    %2211 = vmatprep.subr.mxu0 0.0
    %2212 = vmatpush1.msra.mxu0 0.0
    %2213 = vmatprep.subr.mxu0 0.0
    %2214 = vmatpush1.msra.mxu0 0.0
    %2215 = vmatprep.subr.mxu0 0.0
    %2216 = vmatpush1.msra.mxu0 0.0
    %2217 = vmatprep.mubr.f32.mxu0 0.0
    %2218 = vmatmul.mubr.f32.gmra.mrb[0].mxu0 %v2151
    %v2219 = vpop.f32.mrb[0].mxu0
    %v2220 = vadd.f32 %v2148, %v2219
    %v2221 = vpop.f32.mrb[0].mxu0
    %2222 = vdwg.mxu0
    %2223 = vrot.lane.b32.xlu0 %v1967, 96
    %v2224 = vpop.permute.xlu0 %2223
    %v2226 = vadd.f32 %v2220, %v2224
    %v2227 = vxor.u32 %v2226, 2147483648
    %v2228 = vmul.f32 %v2227, 1.442695
    %v2229 = vpow.pop %v2228
    %v2230 = vadd.f32 %v2229, 1.0
    %v2231 = vrcp.pop %v2230
    %v2232 = vmul.f32 1.0, %v2231
    %2233 = vrot.lane.b32.xlu0 %v1967, 32
    %v2234 = vpop.permute.xlu0 %2233
    %v2236 = vmul.f32 %v2232, %v2234
    %2238 = vrot.lane.b32.xlu0 %v2236, 64
    %v2239 = vpop.permute.xlu0 %2238
    %v2241 = vadd.f32 %v2220, %v2239
    %v2242 = vtanh.pop %v2241
    %v2243 = vsub.f32 1.0, %v2232
    %2245 = vrot.lane.b32.xlu0 %v2242, 96
    %v2246 = vpop.permute.xlu0 %2245
    %v2248 = vmul.f32 %v2243, %v2246
    %v2249 = vmul.f32 %v2232, %v1894
    %v2250 = vadd.f32 %v2248, %v2249
    %2252 = vrot.lane.b32.xlu0 %v2250, 96
    %v2253 = vpop.permute.xlu0 %2252
    %v2254 = vsel %vm208, %v2253, 0
    %2256 = vmatprep.subr.mxu0 %v186
    %2257 = vmatpush1.msra.mxu0 %v185
    %2258 = vmatprep.subr.mxu0 %v188
    %2259 = vmatpush1.msra.mxu0 %v187
    %2260 = vmatprep.subr.mxu0 %v190
    %2261 = vmatpush1.msra.mxu0 %v189
    %2262 = vmatprep.subr.mxu0 %v192
    %2263 = vmatpush1.msra.mxu0 %v191
    %2264 = vmatprep.subr.mxu0 0.0
    %2265 = vmatpush1.msra.mxu0 0.0
    %2266 = vmatprep.subr.mxu0 0.0
    %2267 = vmatpush1.msra.mxu0 0.0
    %2268 = vmatprep.subr.mxu0 0.0
    %2269 = vmatpush1.msra.mxu0 0.0
    %2270 = vmatprep.subr.mxu0 0.0
    %2271 = vmatpush1.msra.mxu0 0.0
    %2272 = vmatprep.subr.mxu0 0.0
    %2273 = vmatpush1.msra.mxu0 0.0
    %2274 = vmatprep.subr.mxu0 0.0
    %2275 = vmatpush1.msra.mxu0 0.0
    %2276 = vmatprep.subr.mxu0 0.0
    %2277 = vmatpush1.msra.mxu0 0.0
    %2278 = vmatprep.subr.mxu0 0.0
    %2279 = vmatpush1.msra.mxu0 0.0
    %2280 = vmatprep.subr.mxu0 0.0
    %2281 = vmatpush1.msra.mxu0 0.0
    %2282 = vmatprep.subr.mxu0 0.0
    %2283 = vmatpush1.msra.mxu0 0.0
    %2284 = vmatprep.subr.mxu0 0.0
    %2285 = vmatpush1.msra.mxu0 0.0
    %2286 = vmatprep.subr.mxu0 0.0
    %2287 = vmatpush1.msra.mxu0 0.0
    %2288 = vmatprep.subr.mxu0 0.0
    %2289 = vmatpush1.msra.mxu0 0.0
    %2290 = vmatprep.subr.mxu0 0.0
    %2291 = vmatpush1.msra.mxu0 0.0
    %2292 = vmatprep.subr.mxu0 0.0
    %2293 = vmatpush1.msra.mxu0 0.0
    %2294 = vmatprep.subr.mxu0 0.0
    %2295 = vmatpush1.msra.mxu0 0.0
    %2296 = vmatprep.subr.mxu0 0.0
    %2297 = vmatpush1.msra.mxu0 0.0
    %2298 = vmatprep.subr.mxu0 0.0
    %2299 = vmatpush1.msra.mxu0 0.0
    %2300 = vmatprep.subr.mxu0 0.0
    %2301 = vmatpush1.msra.mxu0 0.0
    %2302 = vmatprep.subr.mxu0 0.0
    %2303 = vmatpush1.msra.mxu0 0.0
    %2304 = vmatprep.subr.mxu0 0.0
    %2305 = vmatpush1.msra.mxu0 0.0
    %2306 = vmatprep.subr.mxu0 0.0
    %2307 = vmatpush1.msra.mxu0 0.0
    %2308 = vmatprep.subr.mxu0 0.0
    %2309 = vmatpush1.msra.mxu0 0.0
    %2310 = vmatprep.subr.mxu0 0.0
    %2311 = vmatpush1.msra.mxu0 0.0
    %2312 = vmatprep.subr.mxu0 0.0
    %2313 = vmatpush1.msra.mxu0 0.0
    %2314 = vmatprep.subr.mxu0 0.0
    %2315 = vmatpush1.msra.mxu0 0.0
    %2316 = vmatprep.subr.mxu0 0.0
    %2317 = vmatpush1.msra.mxu0 0.0
    %2318 = vmatprep.subr.mxu0 0.0
    %2319 = vmatpush1.msra.mxu0 0.0
    %2320 = vmatprep.mubr.f32.mxu0 0.0
    %2321 = vmatmul.mubr.f32.gmra.mrb[0].mxu0 %v2254
    %v2322 = vpop.f32.mrb[0].mxu0
    %v2323 = vpop.f32.mrb[0].mxu0
    %v2324 = vadd.f32 %v205, %v2323
    %2325 = vdwg.mxu0
    %2326 = vst.msk [vmem:[#allocation10 + $0xa] sm:$0x3] %vm545, %v2324
    %v2327 = vlaneseq
    %v2328 = vshrl.u32 %v2327, 7
    %v2329 = vsub.s32 %v195, %v2328
    %v2330 = vrot.slane %v2121, %v2329
    %v2331 = vlaneseq
    %v2332 = vshrl.u32 %v2331, 7
    %v2333 = vsub.s32 %v195, %v2332
    %v2334 = vrot.slane %v2126, %v2333
    %v2335 = vsel %vm345, %v2334, %v2330
    %2337 = vst.msk [vmem:[%s9 + $0xa] sm:$0x3] %vm348, %v2335
    %vm2339 = vcmask 254976
    %2340 = vst.msk [vmem:[#allocation11] sm:$0x3] %vm2339, %v2253
    // Predicated region
    $region46: #{tpu_custom_call.1} parent=1 // pred_check
      _
    $region47: #{tpu_custom_call.1} parent=1 // pred_check_branch
      %2342 = sbr.rel (0) target = $region49
    $region48: #{tpu_custom_call.1} parent=1 // pred_region
      %s2344 = ssub.s32 256, 256
      %2345 = vsyncadd [#allocation4], %s2344
      %s2346 = sshll.u32 [#allocation10], 4
      %s2347 = int_to_ptr.vmem [resolvable:$true] %s2346
      %2352 = dma.vmem_to_hbm [thread:$0]  %s2347, 256, %s7, [#allocation4], 128, 128, 8
    $region49: #{tpu_custom_call.1} parent=1 // pred_fallthru
      _
    // Predicated region
    $region50: #{tpu_custom_call.1} parent=1 // pred_check
      _
    $region51: #{tpu_custom_call.1} parent=1 // pred_check_branch
      %2354 = sbr.rel (0) target = $region53
    $region52: #{tpu_custom_call.1} parent=1 // pred_region
      %s2356 = ssub.s32 32, 32
      %2357 = vsyncadd [#allocation12], %s2356
      %s2359 = sshll.u32 [#allocation11], 4
      %s2360 = int_to_ptr.vmem [resolvable:$true] %s2359
      %2362 = dma.vmem_to_hbm [thread:$0]  %s2360, 32, %s8, [#allocation12]
    $region53: #{tpu_custom_call.1} parent=1 // pred_fallthru
      _
    // Predicated region
    $region54: #{tpu_custom_call.1} parent=1 // pred_check
      _
    $region55: #{tpu_custom_call.1} parent=1 // pred_check_branch
      %2364 = sbr.rel (0) target = $region57
    $region56: #{tpu_custom_call.1} parent=1 // pred_region
      _
    $region57: #{tpu_custom_call.1} parent=1 // pred_fallthru
      _
    // Predicated region
    $region58: #{tpu_custom_call.1} parent=1 // pred_check
      _
    $region59: #{tpu_custom_call.1} parent=1 // pred_check_branch
      %2366 = sbr.rel (0) target = $region61
    $region60: #{tpu_custom_call.1} parent=1 // pred_region
      %2367 = dma.done [#allocation4], 256
    $region61: #{tpu_custom_call.1} parent=1 // pred_fallthru
      _
    // Predicated region
    $region62: #{tpu_custom_call.1} parent=1 // pred_check
      _
    $region63: #{tpu_custom_call.1} parent=1 // pred_check_branch
      %2369 = sbr.rel (0) target = $region65
    $region64: #{tpu_custom_call.1} parent=1 // pred_region
      %2370 = dma.done [#allocation12], 32
    $region65: #{tpu_custom_call.1} parent=1 // pred_fallthru
      _
    // Predicated region
    $region66: #{tpu_custom_call.1} parent=1 // pred_check
      _
    $region67: #{tpu_custom_call.1} parent=1 // pred_check_branch
      %2372 = sbr.rel (0) target = $region69
    $region68: #{tpu_custom_call.1} parent=1 // pred_region
      _
    $region69: #{tpu_custom_call.1} parent=1 // pred_fallthru
      _
    %2373 = vsyncpa [#allocation3], 1
    %2374 = vsyncpa [#allocation6], 1
    %2375 = vsyncpa [#allocation9], 1
    %2376 = vsyncpa [#allocation4], 1
    %2377 = vsyncpa [#allocation12], 1

</llo_original>
